<compile_context>
chip_gen: v7x
topology: tpu7x:2x2x1
jax: 0.10.0
libtpu: 0.0.40
codegen_flags: <defaults>
</compile_context>

<pallas_src>
import jax
import jax.numpy as jnp
from jax.experimental import pallas as pl
from jax.experimental.pallas import tpu as pltpu

BN_EPS = 1e-5


# ------------------------------ fused Pallas kernel ---------------------------

def _cell_kernel(x_ref, g1_ref, be1_ref, m1_ref, cb1_ref,
                 g2_ref, be2_ref, m2_ref, cb2_ref,
                 sew1_ref, seb1_ref, sew2_ref, seb2_ref, o_ref):
    B, H, WC = x_ref.shape
    C = sew2_ref.shape[1]
    W = WC // C
    R = B * H
    n = float(B * H * W)

    skip = x_ref[...]                               # (B, H, W*C), lane-dense
    s = skip.reshape(R, WC)                         # (B*H, W*C) = (32, 256)

    # Row masks for the sublane-rolled conv taps (zero rows that would wrap across the
    # height / batch boundary). Computed once, shared by both conv stages.
    row_ids = jax.lax.broadcasted_iota(jnp.int32, (R, 1), 0)
    has_up = (row_ids % H) != 0                     # a valid row h-1 exists
    has_dn = (row_ids % H) != (H - 1)               # a valid row h+1 exists

    def bn_silu_conv(p, gamma_wc, beta_wc, m_ref, cb_wc):
        # --- BatchNorm (training-mode batch stats), one pass, kept at 256 lanes ---
        col_sum = jnp.sum(p, axis=0, keepdims=True)         # (1, W*C) per-(w,c) sums
        col_sq = jnp.sum(p * p, axis=0, keepdims=True)      # (1, W*C)
        # roll-tree over the W groups of C lanes -> channel sums broadcast at all 256 lanes
        shift = C
        while shift < WC:                                    # W must be a power of two
            col_sum = col_sum + pltpu.roll(col_sum, shift, axis=1)
            col_sq = col_sq + pltpu.roll(col_sq, shift, axis=1)
            shift *= 2
        mean = col_sum / n                                   # (1, W*C), channel mean
        var = col_sq / n - mean * mean
        a_wc = gamma_wc * jax.lax.rsqrt(var + BN_EPS)        # fused BN affine, lane-dense
        b_wc = beta_wc - mean * a_wc
        y = p * a_wc + b_wc
        act = y * jax.nn.sigmoid(y)                          # SiLU (EUP)

        # --- 3x3 'same' conv: three row-shifted taps (XLU sublane rolls + boundary masks)
        #     stacked at 256-aligned lane offsets -> ONE bf16 MXU dot against the
        #     (3*W*C, W*C) banded weight matrix (width padding folded into the weights).
        up = jnp.where(has_up, pltpu.roll(act, 1, axis=0), 0.0)       # row h-1
        dn = jnp.where(has_dn, pltpu.roll(act, R - 1, axis=0), 0.0)   # row h+1
        lhs = jnp.concatenate([up, act, dn], axis=1).astype(jnp.bfloat16)   # (R, 3*W*C)
        out = jnp.dot(lhs, m_ref[...], preferred_element_type=jnp.float32)  # (R, W*C) f32
        return out + cb_wc

    s = bn_silu_conv(s, g1_ref[...], be1_ref[...], m1_ref, cb1_ref[...])
    s = bn_silu_conv(s, g2_ref[...], be2_ref[...], m2_ref, cb2_ref[...])

    # --- SE: global avg-pool -> Linear/ReLU -> Linear/Sigmoid -> channel gate ---
    s3 = s.reshape(B, H, WC)
    row_sum = jnp.sum(s3, axis=1)                                        # (B, W*C)
    pooled = jnp.sum(row_sum.reshape(B, W, C), axis=1) / float(H * W)    # (B, C)
    # tiny linears as VPU broadcast-multiply-reduce (kept off the MXU tail)
    hid = jnp.sum(pooled[:, :, None] * sew1_ref[...][None, :, :], axis=1) + seb1_ref[...]
    hid = jnp.maximum(hid, 0.0)                                          # (B, hidden)
    lg = jnp.sum(hid[:, :, None] * sew2_ref[...][None, :, :], axis=1) + seb2_ref[...]
    gate = 0.1 * jax.nn.sigmoid(lg)                    # (B, C); 0.1 residual scale folded in
    gate_wc = jnp.tile(gate, (1, W))                   # (B, W*C)

    o_ref[...] = skip + s3 * gate_wc[:, None, :]       # lane-dense 256-wide store


# ------------------------------ pallas_call wrapper ---------------------------

def _full_spec(shape):
    nd = len(shape)
    return pl.BlockSpec(shape, lambda i, _nd=nd: (0,) * _nd)


def cell_forward(x_nchw, kp):
    B, C, H, W = x_nchw.shape
    # NCHW -> NHWC, fold W and C so the kernel sees a lane-dense last dim (W*C = 256)
    x = jnp.transpose(x_nchw, (0, 2, 3, 1)).reshape(B, H, W * C)
    args = (x, kp['g1'], kp['be1'], kp['M1'], kp['cb1'],
            kp['g2'], kp['be2'], kp['M2'], kp['cb2'],
            kp['sew1'], kp['seb1'], kp['sew2'], kp['seb2'])
    out = pl.pallas_call(
        _cell_kernel,
        out_shape=jax.ShapeDtypeStruct((B, H, W * C), jnp.float32),
        grid=(1,),
        in_specs=[_full_spec(a.shape) for a in args],
        out_specs=_full_spec((B, H, W * C)),
        compiler_params=pltpu.CompilerParams(
            dimension_semantics=("arbitrary",),
            vmem_limit_bytes=32 * 1024 * 1024),
    )(*args)
    return jnp.transpose(out.reshape(B, H, W, C), (0, 3, 1, 2))   # back to NCHW


# ------------------------------ parameter setup -------------------------------

def normalize_conv_weight(w_oihw):
    # Conv2D weight-norm: n = exp(log_weight_norm), log_weight_norm init = log(||w|| + 0.01)
    wn = jnp.sqrt(jnp.sum(w_oihw ** 2, axis=(1, 2, 3), keepdims=True))
    n = jnp.exp(jnp.log(wn + 0.01))
    w = n * w_oihw / (wn + 1e-5)
    return jnp.transpose(w, (2, 3, 1, 0))  # OIHW -> HWIO


def build_banded_weights(w_hwio, W_sp):
    """HWIO (3,3,Cin,Cout) conv weight -> (3, W*Cin, W*Cout) banded matrices.

    'same' width padding is folded in: row index = win*Cin + ci over the UNPADDED width,
    col index = wout*Cout + co, entry = w[kh, win-wout+1, ci, co] when |win-wout| <= 1.
    Out-of-range taps (which would hit zero padding) are simply dropped.
    """
    KH, KW, Cin, Cout = w_hwio.shape
    win = jnp.arange(W_sp)[:, None]
    wout = jnp.arange(W_sp)[None, :]
    kw = win - wout + KW // 2                                   # (W, W)
    valid = ((kw >= 0) & (kw < KW)).astype(w_hwio.dtype)
    kw_c = jnp.clip(kw, 0, KW - 1)
    blocks = w_hwio[:, kw_c] * valid[None, :, :, None, None]    # (KH, W, W, Cin, Cout)
    return jnp.transpose(blocks, (0, 1, 3, 2, 4)).reshape(KH, W_sp * Cin, W_sp * Cout)


def make_params(key, C, hidden):
    ks = jax.random.split(key, 12)
    p = {}
    for i, (kw_, kb, kg, kbe) in enumerate([(ks[0], ks[1], ks[2], ks[3]),
                                            (ks[4], ks[5], ks[6], ks[7])], start=1):
        w_oihw = 0.1 * jax.random.normal(kw_, (C, C, 3, 3), jnp.float32)
        p[f'w{i}'] = normalize_conv_weight(w_oihw)                     # (3,3,C,C) HWIO
        p[f'cb{i}'] = 0.1 * jax.random.normal(kb, (1, C), jnp.float32)
        p[f'g{i}'] = 1.0 + 0.1 * jax.random.normal(kg, (1, C), jnp.float32)
        p[f'be{i}'] = 0.1 * jax.random.normal(kbe, (1, C), jnp.float32)
    # SE: Linear(C -> hidden), Linear(hidden -> C); stored as (in, out)
    p['sew1'] = 0.2 * jax.random.normal(ks[8], (C, hidden), jnp.float32)
    p['seb1'] = 0.1 * jax.random.normal(ks[9], (1, hidden), jnp.float32)
    p['sew2'] = 0.2 * jax.random.normal(ks[10], (hidden, C), jnp.float32)
    p['seb2'] = 0.1 * jax.random.normal(ks[11], (1, C), jnp.float32)
    return p


def prepare_kernel_params(p, W):
    """Wrapper-side layout plumbing: bf16 banded conv weights (K-stacked, W-pad folded in)
    and W-tiled BN/conv-bias vectors so the kernel never drops below 256 lanes."""
    assert W & (W - 1) == 0, "roll-tree BN reduction assumes power-of-two W"
    kp = {}
    for i in (1, 2):
        kp[f'g{i}'] = jnp.tile(p[f'g{i}'], (1, W))                     # (1, W*C)
        kp[f'be{i}'] = jnp.tile(p[f'be{i}'], (1, W))                   # (1, W*C)
        M = build_banded_weights(p[f'w{i}'], W)                        # (3, W*C, W*C)
        kp[f'M{i}'] = M.reshape(3 * M.shape[1], M.shape[2]).astype(jnp.bfloat16)  # (3WC, WC)
        kp[f'cb{i}'] = jnp.tile(p[f'cb{i}'], (1, W))                   # (1, W*C)
    kp['sew1'], kp['seb1'] = p['sew1'], p['seb1']
    kp['sew2'], kp['seb2'] = p['sew2'], p['seb2']
    return kp


# ------------------------------ pure-JAX reference -----------------------------

def cell_reference(x_nchw, p):
    x = jnp.transpose(x_nchw, (0, 2, 3, 1))
    skip = x
    s = x
    for i in (1, 2):
        mean = jnp.mean(s, axis=(0, 1, 2), keepdims=True)
        var = jnp.mean((s - mean) ** 2, axis=(0, 1, 2), keepdims=True)
        y = p[f'g{i}'] * ((s - mean) / jnp.sqrt(var + BN_EPS)) + p[f'be{i}']
        a = y * jax.nn.sigmoid(y)
        s = jax.lax.conv_general_dilated(
            a, p[f'w{i}'], (1, 1), 'SAME',
            dimension_numbers=('NHWC', 'HWIO', 'NHWC'),
            precision=jax.lax.Precision.HIGHEST) + p[f'cb{i}']
    pooled = jnp.mean(s, axis=(1, 2))
    h = jax.nn.relu(pooled @ p['sew1'] + p['seb1'])
    gate = jax.nn.sigmoid(h @ p['sew2'] + p['seb2'])
    out = skip + 0.1 * (s * gate[:, None, None, :])
    return jnp.transpose(out, (0, 3, 1, 2))


# ----------------------------------- main --------------------------------------

if __name__ == "__main__":
    B, C, H, W = 2, 16, 16, 16
    hidden = max(C // 16, 4)  # SE hidden size as in the torch module

    key = jax.random.PRNGKey(0)
    kx, kp_key = jax.random.split(key)
    x = jax.random.normal(kx, (B, C, H, W), jnp.float32)   # NCHW, like torch
    params = make_params(kp_key, C, hidden)
    kparams = prepare_kernel_params(params, W)

    out = cell_forward(x, kparams)
    out = jax.block_until_ready(out)

    ref = cell_reference(x, params)
    assert out.shape == (B, C, H, W)
    err = float(jnp.max(jnp.abs(out - ref)))
    assert jnp.allclose(out, ref, rtol=3e-3, atol=3e-3), (
        "mismatch vs reference: max abs err = %e" % err)

    print("KERNEL_OK")
</pallas_src>

<mosaic_0001>
module attributes {stable_mosaic.version = 11 : i64} {
  func.func @_cell_kernel(%arg0: i32, %arg1: memref<2x16x256xf32, #tpu.memory_space<vmem>>, %arg2: memref<1x256xf32, #tpu.memory_space<vmem>>, %arg3: memref<1x256xf32, #tpu.memory_space<vmem>>, %arg4: memref<768x256xbf16, #tpu.memory_space<vmem>>, %arg5: memref<1x256xf32, #tpu.memory_space<vmem>>, %arg6: memref<1x256xf32, #tpu.memory_space<vmem>>, %arg7: memref<1x256xf32, #tpu.memory_space<vmem>>, %arg8: memref<768x256xbf16, #tpu.memory_space<vmem>>, %arg9: memref<1x256xf32, #tpu.memory_space<vmem>>, %arg10: memref<16x4xf32, #tpu.memory_space<vmem>>, %arg11: memref<1x4xf32, #tpu.memory_space<vmem>>, %arg12: memref<4x16xf32, #tpu.memory_space<vmem>>, %arg13: memref<1x16xf32, #tpu.memory_space<vmem>>, %arg14: memref<2x16x256xf32, #tpu.memory_space<vmem>>) attributes {dimension_semantics = [#tpu.dimension_semantics<arbitrary>], iteration_bounds = array<i64: 1>, scalar_prefetch = 0 : i64, scratch_operands = 0 : i64, tpu.core_type = #tpu.core_type<tc>, window_params = [{pipeline_mode = #tpu.pipeline_mode<synchronous>, transform_indices = @transform_0, window_bounds = array<i64: 2, 16, 256>}, {pipeline_mode = #tpu.pipeline_mode<synchronous>, transform_indices = @transform_1, window_bounds = array<i64: 1, 256>}, {pipeline_mode = #tpu.pipeline_mode<synchronous>, transform_indices = @transform_2, window_bounds = array<i64: 1, 256>}, {pipeline_mode = #tpu.pipeline_mode<synchronous>, transform_indices = @transform_3, window_bounds = array<i64: 768, 256>}, {pipeline_mode = #tpu.pipeline_mode<synchronous>, transform_indices = @transform_4, window_bounds = array<i64: 1, 256>}, {pipeline_mode = #tpu.pipeline_mode<synchronous>, transform_indices = @transform_5, window_bounds = array<i64: 1, 256>}, {pipeline_mode = #tpu.pipeline_mode<synchronous>, transform_indices = @transform_6, window_bounds = array<i64: 1, 256>}, {pipeline_mode = #tpu.pipeline_mode<synchronous>, transform_indices = @transform_7, window_bounds = array<i64: 768, 256>}, {pipeline_mode = #tpu.pipeline_mode<synchronous>, transform_indices = @transform_8, window_bounds = array<i64: 1, 256>}, {pipeline_mode = #tpu.pipeline_mode<synchronous>, transform_indices = @transform_9, window_bounds = array<i64: 16, 4>}, {pipeline_mode = #tpu.pipeline_mode<synchronous>, transform_indices = @transform_10, window_bounds = array<i64: 1, 4>}, {pipeline_mode = #tpu.pipeline_mode<synchronous>, transform_indices = @transform_11, window_bounds = array<i64: 4, 16>}, {pipeline_mode = #tpu.pipeline_mode<synchronous>, transform_indices = @transform_12, window_bounds = array<i64: 1, 16>}, {pipeline_mode = #tpu.pipeline_mode<synchronous>, transform_indices = @transform_13, window_bounds = array<i64: 2, 16, 256>}]} {
    %c0 = arith.constant 0 : index
    %c0_0 = arith.constant 0 : index
    %c0_1 = arith.constant 0 : index
    %0 = vector.load %arg1[%c0, %c0_0, %c0_1] : memref<2x16x256xf32, #tpu.memory_space<vmem>>, vector<2x16x256xf32>
    %1 = vector.shape_cast %0 : vector<2x16x256xf32> to vector<32x256xf32>
    %2 = tpu.iota {dimensions = array<i32: 0>} : vector<32x1xi32>
    %c16_i32 = arith.constant 16 : i32
    %c0_i32 = arith.constant 0 : i32
    %3 = arith.cmpi eq, %c16_i32, %c0_i32 : i32
    %c1_i32 = arith.constant 1 : i32
    %4 = arith.select %3, %c1_i32, %c16_i32 : i32
    %5 = vector.broadcast %4 : i32 to vector<32x1xi32>
    %6 = arith.remsi %2, %5 : vector<32x1xi32>
    %c0_i32_2 = arith.constant 0 : i32
    %7 = vector.broadcast %c0_i32_2 : i32 to vector<32x1xi32>
    %8 = arith.cmpi ne, %6, %7 : vector<32x1xi32>
    %c0_i32_3 = arith.constant 0 : i32
    %9 = vector.broadcast %c0_i32_3 : i32 to vector<32x1xi32>
    %10 = arith.cmpi slt, %6, %9 : vector<32x1xi32>
    %c0_i32_4 = arith.constant 0 : i32
    %11 = arith.cmpi slt, %4, %c0_i32_4 : i32
    %12 = vector.broadcast %11 : i1 to vector<32x1xi1>
    %13 = vector.broadcast %12 : vector<32x1xi1> to vector<32x1xi1>
    %14 = arith.xori %10, %13 : vector<32x1xi1>
    %15 = arith.andi %14, %8 : vector<32x1xi1>
    %16 = vector.broadcast %4 : i32 to vector<32x1xi32>
    %17 = arith.addi %6, %16 : vector<32x1xi32>
    %18 = arith.select %15, %17, %6 : vector<32x1xi1>, vector<32x1xi32>
    %c0_i32_5 = arith.constant 0 : i32
    %19 = vector.broadcast %c0_i32_5 : i32 to vector<32x1xi32>
    %20 = arith.cmpi ne, %18, %19 : vector<32x1xi32>
    %c16_i32_6 = arith.constant 16 : i32
    %c0_i32_7 = arith.constant 0 : i32
    %21 = arith.cmpi eq, %c16_i32_6, %c0_i32_7 : i32
    %c1_i32_8 = arith.constant 1 : i32
    %22 = arith.select %21, %c1_i32_8, %c16_i32_6 : i32
    %23 = vector.broadcast %22 : i32 to vector<32x1xi32>
    %24 = arith.remsi %2, %23 : vector<32x1xi32>
    %c0_i32_9 = arith.constant 0 : i32
    %25 = vector.broadcast %c0_i32_9 : i32 to vector<32x1xi32>
    %26 = arith.cmpi ne, %24, %25 : vector<32x1xi32>
    %c0_i32_10 = arith.constant 0 : i32
    %27 = vector.broadcast %c0_i32_10 : i32 to vector<32x1xi32>
    %28 = arith.cmpi slt, %24, %27 : vector<32x1xi32>
    %c0_i32_11 = arith.constant 0 : i32
    %29 = arith.cmpi slt, %22, %c0_i32_11 : i32
    %30 = vector.broadcast %29 : i1 to vector<32x1xi1>
    %31 = vector.broadcast %30 : vector<32x1xi1> to vector<32x1xi1>
    %32 = arith.xori %28, %31 : vector<32x1xi1>
    %33 = arith.andi %32, %26 : vector<32x1xi1>
    %34 = vector.broadcast %22 : i32 to vector<32x1xi32>
    %35 = arith.addi %24, %34 : vector<32x1xi32>
    %36 = arith.select %33, %35, %24 : vector<32x1xi1>, vector<32x1xi32>
    %c15_i32 = arith.constant 15 : i32
    %37 = vector.broadcast %c15_i32 : i32 to vector<32x1xi32>
    %38 = arith.cmpi ne, %36, %37 : vector<32x1xi32>
    %c0_12 = arith.constant 0 : index
    %c0_13 = arith.constant 0 : index
    %39 = vector.load %arg2[%c0_12, %c0_13] : memref<1x256xf32, #tpu.memory_space<vmem>>, vector<1x256xf32>
    %c0_14 = arith.constant 0 : index
    %c0_15 = arith.constant 0 : index
    %40 = vector.load %arg3[%c0_14, %c0_15] : memref<1x256xf32, #tpu.memory_space<vmem>>, vector<1x256xf32>
    %c0_16 = arith.constant 0 : index
    %c0_17 = arith.constant 0 : index
    %41 = vector.load %arg5[%c0_16, %c0_17] : memref<1x256xf32, #tpu.memory_space<vmem>>, vector<1x256xf32>
    %cst = arith.constant dense<0.000000e+00> : vector<256xf32>
    %42 = vector.multi_reduction <add>, %1, %cst [0] : vector<32x256xf32> to vector<256xf32>
    %43 = vector.shape_cast %42 : vector<256xf32> to vector<1x256xf32>
    %44 = arith.mulf %1, %1 : vector<32x256xf32>
    %cst_18 = arith.constant dense<0.000000e+00> : vector<256xf32>
    %45 = vector.multi_reduction <add>, %44, %cst_18 [0] : vector<32x256xf32> to vector<256xf32>
    %46 = vector.shape_cast %45 : vector<256xf32> to vector<1x256xf32>
    %c16_i32_19 = arith.constant 16 : i32
    %47 = tpu.dynamic_rotate %43 by %c16_i32_19 dim 1 : vector<1x256xf32>, i32 -> vector<1x256xf32>
    %48 = arith.addf %43, %47 : vector<1x256xf32>
    %c16_i32_20 = arith.constant 16 : i32
    %49 = tpu.dynamic_rotate %46 by %c16_i32_20 dim 1 : vector<1x256xf32>, i32 -> vector<1x256xf32>
    %50 = arith.addf %46, %49 : vector<1x256xf32>
    %c32_i32 = arith.constant 32 : i32
    %51 = tpu.dynamic_rotate %48 by %c32_i32 dim 1 : vector<1x256xf32>, i32 -> vector<1x256xf32>
    %52 = arith.addf %48, %51 : vector<1x256xf32>
    %c32_i32_21 = arith.constant 32 : i32
    %53 = tpu.dynamic_rotate %50 by %c32_i32_21 dim 1 : vector<1x256xf32>, i32 -> vector<1x256xf32>
    %54 = arith.addf %50, %53 : vector<1x256xf32>
    %c64_i32 = arith.constant 64 : i32
    %55 = tpu.dynamic_rotate %52 by %c64_i32 dim 1 : vector<1x256xf32>, i32 -> vector<1x256xf32>
    %56 = arith.addf %52, %55 : vector<1x256xf32>
    %c64_i32_22 = arith.constant 64 : i32
    %57 = tpu.dynamic_rotate %54 by %c64_i32_22 dim 1 : vector<1x256xf32>, i32 -> vector<1x256xf32>
    %58 = arith.addf %54, %57 : vector<1x256xf32>
    %c128_i32 = arith.constant 128 : i32
    %59 = tpu.dynamic_rotate %56 by %c128_i32 dim 1 : vector<1x256xf32>, i32 -> vector<1x256xf32>
    %60 = arith.addf %56, %59 : vector<1x256xf32>
    %c128_i32_23 = arith.constant 128 : i32
    %61 = tpu.dynamic_rotate %58 by %c128_i32_23 dim 1 : vector<1x256xf32>, i32 -> vector<1x256xf32>
    %62 = arith.addf %58, %61 : vector<1x256xf32>
    %cst_24 = arith.constant 5.120000e+02 : f32
    %63 = vector.broadcast %cst_24 : f32 to vector<1x256xf32>
    %64 = arith.divf %60, %63 : vector<1x256xf32>
    %cst_25 = arith.constant 5.120000e+02 : f32
    %65 = vector.broadcast %cst_25 : f32 to vector<1x256xf32>
    %66 = arith.divf %62, %65 : vector<1x256xf32>
    %67 = arith.mulf %64, %64 : vector<1x256xf32>
    %68 = arith.subf %66, %67 : vector<1x256xf32>
    %cst_26 = arith.constant 9.99999974E-6 : f32
    %69 = vector.broadcast %cst_26 : f32 to vector<1x256xf32>
    %70 = arith.addf %68, %69 : vector<1x256xf32>
    %71 = math.rsqrt %70 : vector<1x256xf32>
    %72 = arith.mulf %39, %71 : vector<1x256xf32>
    %73 = arith.mulf %64, %72 : vector<1x256xf32>
    %74 = arith.subf %40, %73 : vector<1x256xf32>
    %75 = vector.broadcast %72 : vector<1x256xf32> to vector<32x256xf32>
    %76 = arith.mulf %1, %75 : vector<32x256xf32>
    %77 = vector.broadcast %74 : vector<1x256xf32> to vector<32x256xf32>
    %78 = arith.addf %76, %77 : vector<32x256xf32>
    %79 = arith.negf %78 : vector<32x256xf32>
    %80 = math.exp %79 : vector<32x256xf32>
    %cst_27 = arith.constant 1.000000e+00 : f32
    %81 = vector.broadcast %cst_27 : f32 to vector<32x256xf32>
    %82 = arith.addf %81, %80 : vector<32x256xf32>
    %83 = arith.divf %81, %82 : vector<32x256xf32>
    %84 = arith.mulf %78, %83 : vector<32x256xf32>
    %c1_i32_28 = arith.constant 1 : i32
    %85 = tpu.dynamic_rotate %84 by %c1_i32_28 dim 0 : vector<32x256xf32>, i32 -> vector<32x256xf32>
    %cst_29 = arith.constant 0.000000e+00 : f32
    %86 = vector.shape_cast %20 : vector<32x1xi1> to vector<32x1xi1>
    %87 = vector.broadcast %86 : vector<32x1xi1> to vector<32x256xi1>
    %88 = vector.broadcast %cst_29 : f32 to vector<32x256xf32>
    %89 = arith.select %87, %85, %88 : vector<32x256xi1>, vector<32x256xf32>
    %c31_i32 = arith.constant 31 : i32
    %90 = tpu.dynamic_rotate %84 by %c31_i32 dim 0 : vector<32x256xf32>, i32 -> vector<32x256xf32>
    %cst_30 = arith.constant 0.000000e+00 : f32
    %91 = vector.shape_cast %38 : vector<32x1xi1> to vector<32x1xi1>
    %92 = vector.broadcast %91 : vector<32x1xi1> to vector<32x256xi1>
    %93 = vector.broadcast %cst_30 : f32 to vector<32x256xf32>
    %94 = arith.select %92, %90, %93 : vector<32x256xi1>, vector<32x256xf32>
    %95 = tpu.concatenate %89, %84, %94 in 1 : vector<32x256xf32>, vector<32x256xf32>, vector<32x256xf32> -> vector<32x768xf32>
    %96 = arith.truncf %95 : vector<32x768xf32> to vector<32x768xbf16>
    %c0_31 = arith.constant 0 : index
    %c0_32 = arith.constant 0 : index
    %97 = vector.load %arg4[%c0_31, %c0_32] : memref<768x256xbf16, #tpu.memory_space<vmem>>, vector<768x256xbf16>
    %cst_33 = arith.constant dense<0.000000e+00> : vector<32x256xf32>
    %98 = tpu.matmul %96, %97, %cst_33 {dimension_numbers = #tpu.dot_dimension_numbers<[1], [0], [0], [1], [0, 0, 1, 1], [], []>} : vector<32x768xbf16>, vector<768x256xbf16>, vector<32x256xf32> -> vector<32x256xf32>
    %99 = vector.broadcast %41 : vector<1x256xf32> to vector<32x256xf32>
    %100 = arith.addf %98, %99 : vector<32x256xf32>
    %c0_34 = arith.constant 0 : index
    %c0_35 = arith.constant 0 : index
    %101 = vector.load %arg6[%c0_34, %c0_35] : memref<1x256xf32, #tpu.memory_space<vmem>>, vector<1x256xf32>
    %c0_36 = arith.constant 0 : index
    %c0_37 = arith.constant 0 : index
    %102 = vector.load %arg7[%c0_36, %c0_37] : memref<1x256xf32, #tpu.memory_space<vmem>>, vector<1x256xf32>
    %c0_38 = arith.constant 0 : index
    %c0_39 = arith.constant 0 : index
    %103 = vector.load %arg9[%c0_38, %c0_39] : memref<1x256xf32, #tpu.memory_space<vmem>>, vector<1x256xf32>
    %cst_40 = arith.constant dense<0.000000e+00> : vector<256xf32>
    %104 = vector.multi_reduction <add>, %100, %cst_40 [0] : vector<32x256xf32> to vector<256xf32>
    %105 = vector.shape_cast %104 : vector<256xf32> to vector<1x256xf32>
    %106 = arith.mulf %100, %100 : vector<32x256xf32>
    %cst_41 = arith.constant dense<0.000000e+00> : vector<256xf32>
    %107 = vector.multi_reduction <add>, %106, %cst_41 [0] : vector<32x256xf32> to vector<256xf32>
    %108 = vector.shape_cast %107 : vector<256xf32> to vector<1x256xf32>
    %c16_i32_42 = arith.constant 16 : i32
    %109 = tpu.dynamic_rotate %105 by %c16_i32_42 dim 1 : vector<1x256xf32>, i32 -> vector<1x256xf32>
    %110 = arith.addf %105, %109 : vector<1x256xf32>
    %c16_i32_43 = arith.constant 16 : i32
    %111 = tpu.dynamic_rotate %108 by %c16_i32_43 dim 1 : vector<1x256xf32>, i32 -> vector<1x256xf32>
    %112 = arith.addf %108, %111 : vector<1x256xf32>
    %c32_i32_44 = arith.constant 32 : i32
    %113 = tpu.dynamic_rotate %110 by %c32_i32_44 dim 1 : vector<1x256xf32>, i32 -> vector<1x256xf32>
    %114 = arith.addf %110, %113 : vector<1x256xf32>
    %c32_i32_45 = arith.constant 32 : i32
    %115 = tpu.dynamic_rotate %112 by %c32_i32_45 dim 1 : vector<1x256xf32>, i32 -> vector<1x256xf32>
    %116 = arith.addf %112, %115 : vector<1x256xf32>
    %c64_i32_46 = arith.constant 64 : i32
    %117 = tpu.dynamic_rotate %114 by %c64_i32_46 dim 1 : vector<1x256xf32>, i32 -> vector<1x256xf32>
    %118 = arith.addf %114, %117 : vector<1x256xf32>
    %c64_i32_47 = arith.constant 64 : i32
    %119 = tpu.dynamic_rotate %116 by %c64_i32_47 dim 1 : vector<1x256xf32>, i32 -> vector<1x256xf32>
    %120 = arith.addf %116, %119 : vector<1x256xf32>
    %c128_i32_48 = arith.constant 128 : i32
    %121 = tpu.dynamic_rotate %118 by %c128_i32_48 dim 1 : vector<1x256xf32>, i32 -> vector<1x256xf32>
    %122 = arith.addf %118, %121 : vector<1x256xf32>
    %c128_i32_49 = arith.constant 128 : i32
    %123 = tpu.dynamic_rotate %120 by %c128_i32_49 dim 1 : vector<1x256xf32>, i32 -> vector<1x256xf32>
    %124 = arith.addf %120, %123 : vector<1x256xf32>
    %cst_50 = arith.constant 5.120000e+02 : f32
    %125 = vector.broadcast %cst_50 : f32 to vector<1x256xf32>
    %126 = arith.divf %122, %125 : vector<1x256xf32>
    %cst_51 = arith.constant 5.120000e+02 : f32
    %127 = vector.broadcast %cst_51 : f32 to vector<1x256xf32>
    %128 = arith.divf %124, %127 : vector<1x256xf32>
    %129 = arith.mulf %126, %126 : vector<1x256xf32>
    %130 = arith.subf %128, %129 : vector<1x256xf32>
    %cst_52 = arith.constant 9.99999974E-6 : f32
    %131 = vector.broadcast %cst_52 : f32 to vector<1x256xf32>
    %132 = arith.addf %130, %131 : vector<1x256xf32>
    %133 = math.rsqrt %132 : vector<1x256xf32>
    %134 = arith.mulf %101, %133 : vector<1x256xf32>
    %135 = arith.mulf %126, %134 : vector<1x256xf32>
    %136 = arith.subf %102, %135 : vector<1x256xf32>
    %137 = vector.broadcast %134 : vector<1x256xf32> to vector<32x256xf32>
    %138 = arith.mulf %100, %137 : vector<32x256xf32>
    %139 = vector.broadcast %136 : vector<1x256xf32> to vector<32x256xf32>
    %140 = arith.addf %138, %139 : vector<32x256xf32>
    %141 = arith.negf %140 : vector<32x256xf32>
    %142 = math.exp %141 : vector<32x256xf32>
    %cst_53 = arith.constant 1.000000e+00 : f32
    %143 = vector.broadcast %cst_53 : f32 to vector<32x256xf32>
    %144 = arith.addf %143, %142 : vector<32x256xf32>
    %145 = arith.divf %143, %144 : vector<32x256xf32>
    %146 = arith.mulf %140, %145 : vector<32x256xf32>
    %c1_i32_54 = arith.constant 1 : i32
    %147 = tpu.dynamic_rotate %146 by %c1_i32_54 dim 0 : vector<32x256xf32>, i32 -> vector<32x256xf32>
    %cst_55 = arith.constant 0.000000e+00 : f32
    %148 = vector.shape_cast %20 : vector<32x1xi1> to vector<32x1xi1>
    %149 = vector.broadcast %148 : vector<32x1xi1> to vector<32x256xi1>
    %150 = vector.broadcast %cst_55 : f32 to vector<32x256xf32>
    %151 = arith.select %149, %147, %150 : vector<32x256xi1>, vector<32x256xf32>
    %c31_i32_56 = arith.constant 31 : i32
    %152 = tpu.dynamic_rotate %146 by %c31_i32_56 dim 0 : vector<32x256xf32>, i32 -> vector<32x256xf32>
    %cst_57 = arith.constant 0.000000e+00 : f32
    %153 = vector.shape_cast %38 : vector<32x1xi1> to vector<32x1xi1>
    %154 = vector.broadcast %153 : vector<32x1xi1> to vector<32x256xi1>
    %155 = vector.broadcast %cst_57 : f32 to vector<32x256xf32>
    %156 = arith.select %154, %152, %155 : vector<32x256xi1>, vector<32x256xf32>
    %157 = tpu.concatenate %151, %146, %156 in 1 : vector<32x256xf32>, vector<32x256xf32>, vector<32x256xf32> -> vector<32x768xf32>
    %158 = arith.truncf %157 : vector<32x768xf32> to vector<32x768xbf16>
    %c0_58 = arith.constant 0 : index
    %c0_59 = arith.constant 0 : index
    %159 = vector.load %arg8[%c0_58, %c0_59] : memref<768x256xbf16, #tpu.memory_space<vmem>>, vector<768x256xbf16>
    %cst_60 = arith.constant dense<0.000000e+00> : vector<32x256xf32>
    %160 = tpu.matmul %158, %159, %cst_60 {dimension_numbers = #tpu.dot_dimension_numbers<[1], [0], [0], [1], [0, 0, 1, 1], [], []>} : vector<32x768xbf16>, vector<768x256xbf16>, vector<32x256xf32> -> vector<32x256xf32>
    %161 = vector.broadcast %103 : vector<1x256xf32> to vector<32x256xf32>
    %162 = arith.addf %160, %161 : vector<32x256xf32>
    %163 = vector.shape_cast %162 : vector<32x256xf32> to vector<2x16x256xf32>
    %cst_61 = arith.constant dense<0.000000e+00> : vector<2x256xf32>
    %164 = vector.multi_reduction <add>, %163, %cst_61 [1] : vector<2x16x256xf32> to vector<2x256xf32>
    %165 = vector.shape_cast %164 : vector<2x256xf32> to vector<2x16x16xf32>
    %cst_62 = arith.constant dense<0.000000e+00> : vector<2x16xf32>
    %166 = vector.multi_reduction <add>, %165, %cst_62 [1] : vector<2x16x16xf32> to vector<2x16xf32>
    %cst_63 = arith.constant 2.560000e+02 : f32
    %167 = vector.broadcast %cst_63 : f32 to vector<2x16xf32>
    %168 = arith.divf %166, %167 : vector<2x16xf32>
    %169 = vector.shape_cast %168 : vector<2x16xf32> to vector<2x16x1xf32>
    %c0_64 = arith.constant 0 : index
    %c0_65 = arith.constant 0 : index
    %170 = vector.load %arg10[%c0_64, %c0_65] : memref<16x4xf32, #tpu.memory_space<vmem>>, vector<16x4xf32>
    %171 = vector.shape_cast %170 : vector<16x4xf32> to vector<1x16x4xf32>
    %172 = vector.broadcast %169 : vector<2x16x1xf32> to vector<2x16x4xf32>
    %173 = vector.broadcast %171 : vector<1x16x4xf32> to vector<2x16x4xf32>
    %174 = arith.mulf %172, %173 : vector<2x16x4xf32>
    %cst_66 = arith.constant dense<0.000000e+00> : vector<2x4xf32>
    %175 = vector.multi_reduction <add>, %174, %cst_66 [1] : vector<2x16x4xf32> to vector<2x4xf32>
    %c0_67 = arith.constant 0 : index
    %c0_68 = arith.constant 0 : index
    %176 = vector.load %arg11[%c0_67, %c0_68] : memref<1x4xf32, #tpu.memory_space<vmem>>, vector<1x4xf32>
    %177 = vector.broadcast %176 : vector<1x4xf32> to vector<2x4xf32>
    %178 = arith.addf %175, %177 : vector<2x4xf32>
    %cst_69 = arith.constant 0.000000e+00 : f32
    %179 = vector.broadcast %cst_69 : f32 to vector<2x4xf32>
    %180 = arith.maximumf %178, %179 : vector<2x4xf32>
    %181 = vector.shape_cast %180 : vector<2x4xf32> to vector<2x4x1xf32>
    %c0_70 = arith.constant 0 : index
    %c0_71 = arith.constant 0 : index
    %182 = vector.load %arg12[%c0_70, %c0_71] : memref<4x16xf32, #tpu.memory_space<vmem>>, vector<4x16xf32>
    %183 = vector.shape_cast %182 : vector<4x16xf32> to vector<1x4x16xf32>
    %184 = vector.broadcast %181 : vector<2x4x1xf32> to vector<2x4x16xf32>
    %185 = vector.broadcast %183 : vector<1x4x16xf32> to vector<2x4x16xf32>
    %186 = arith.mulf %184, %185 : vector<2x4x16xf32>
    %cst_72 = arith.constant dense<0.000000e+00> : vector<2x16xf32>
    %187 = vector.multi_reduction <add>, %186, %cst_72 [1] : vector<2x4x16xf32> to vector<2x16xf32>
    %c0_73 = arith.constant 0 : index
    %c0_74 = arith.constant 0 : index
    %188 = vector.load %arg13[%c0_73, %c0_74] : memref<1x16xf32, #tpu.memory_space<vmem>>, vector<1x16xf32>
    %189 = vector.broadcast %188 : vector<1x16xf32> to vector<2x16xf32>
    %190 = arith.addf %187, %189 : vector<2x16xf32>
    %191 = arith.negf %190 : vector<2x16xf32>
    %192 = math.exp %191 : vector<2x16xf32>
    %cst_75 = arith.constant 1.000000e+00 : f32
    %193 = vector.broadcast %cst_75 : f32 to vector<2x16xf32>
    %194 = arith.addf %193, %192 : vector<2x16xf32>
    %195 = arith.divf %193, %194 : vector<2x16xf32>
    %cst_76 = arith.constant 1.000000e-01 : f32
    %196 = vector.broadcast %cst_76 : f32 to vector<2x16xf32>
    %197 = arith.mulf %196, %195 : vector<2x16xf32>
    %198 = tpu.concatenate %197, %197, %197, %197, %197, %197, %197, %197, %197, %197, %197, %197, %197, %197, %197, %197 in 1 : vector<2x16xf32>, vector<2x16xf32>, vector<2x16xf32>, vector<2x16xf32>, vector<2x16xf32>, vector<2x16xf32>, vector<2x16xf32>, vector<2x16xf32>, vector<2x16xf32>, vector<2x16xf32>, vector<2x16xf32>, vector<2x16xf32>, vector<2x16xf32>, vector<2x16xf32>, vector<2x16xf32>, vector<2x16xf32> -> vector<2x256xf32>
    %199 = vector.shape_cast %198 : vector<2x256xf32> to vector<2x1x256xf32>
    %200 = vector.broadcast %199 : vector<2x1x256xf32> to vector<2x16x256xf32>
    %201 = arith.mulf %163, %200 : vector<2x16x256xf32>
    %202 = arith.addf %0, %201 : vector<2x16x256xf32>
    %c0_77 = arith.constant 0 : index
    %c0_78 = arith.constant 0 : index
    %c0_79 = arith.constant 0 : index
    %203 = vector.load %arg14[%c0_77, %c0_78, %c0_79] : memref<2x16x256xf32, #tpu.memory_space<vmem>>, vector<2x16x256xf32>
    tpu.vector_store %arg14[%c0_77, %c0_78, %c0_79], %202 {strides = array<i32>} : memref<2x16x256xf32, #tpu.memory_space<vmem>>, vector<2x16x256xf32>,
    return
  }
  func.func @transform_0(%arg0: i32) -> (i32, i32, i32) {
    %c0_i32 = arith.constant 0 : i32
    %c0_i32_0 = arith.constant 0 : i32
    %c0_i32_1 = arith.constant 0 : i32
    %c0_i32_2 = arith.constant 0 : i32
    return %c0_i32, %c0_i32_0, %c0_i32_1 : i32, i32, i32
  }
  func.func @transform_1(%arg0: i32) -> (i32, i32) {
    %c0_i32 = arith.constant 0 : i32
    %c0_i32_0 = arith.constant 0 : i32
    %c0_i32_1 = arith.constant 0 : i32
    return %c0_i32, %c0_i32_0 : i32, i32
  }
  func.func @transform_2(%arg0: i32) -> (i32, i32) {
    %c0_i32 = arith.constant 0 : i32
    %c0_i32_0 = arith.constant 0 : i32
    %c0_i32_1 = arith.constant 0 : i32
    return %c0_i32, %c0_i32_0 : i32, i32
  }
  func.func @transform_3(%arg0: i32) -> (i32, i32) {
    %c0_i32 = arith.constant 0 : i32
    %c0_i32_0 = arith.constant 0 : i32
    %c0_i32_1 = arith.constant 0 : i32
    return %c0_i32, %c0_i32_0 : i32, i32
  }
  func.func @transform_4(%arg0: i32) -> (i32, i32) {
    %c0_i32 = arith.constant 0 : i32
    %c0_i32_0 = arith.constant 0 : i32
    %c0_i32_1 = arith.constant 0 : i32
    return %c0_i32, %c0_i32_0 : i32, i32
  }
  func.func @transform_5(%arg0: i32) -> (i32, i32) {
    %c0_i32 = arith.constant 0 : i32
    %c0_i32_0 = arith.constant 0 : i32
    %c0_i32_1 = arith.constant 0 : i32
    return %c0_i32, %c0_i32_0 : i32, i32
  }
  func.func @transform_6(%arg0: i32) -> (i32, i32) {
    %c0_i32 = arith.constant 0 : i32
    %c0_i32_0 = arith.constant 0 : i32
    %c0_i32_1 = arith.constant 0 : i32
    return %c0_i32, %c0_i32_0 : i32, i32
  }
  func.func @transform_7(%arg0: i32) -> (i32, i32) {
    %c0_i32 = arith.constant 0 : i32
    %c0_i32_0 = arith.constant 0 : i32
    %c0_i32_1 = arith.constant 0 : i32
    return %c0_i32, %c0_i32_0 : i32, i32
  }
  func.func @transform_8(%arg0: i32) -> (i32, i32) {
    %c0_i32 = arith.constant 0 : i32
    %c0_i32_0 = arith.constant 0 : i32
    %c0_i32_1 = arith.constant 0 : i32
    return %c0_i32, %c0_i32_0 : i32, i32
  }
  func.func @transform_9(%arg0: i32) -> (i32, i32) {
    %c0_i32 = arith.constant 0 : i32
    %c0_i32_0 = arith.constant 0 : i32
    %c0_i32_1 = arith.constant 0 : i32
    return %c0_i32, %c0_i32_0 : i32, i32
  }
  func.func @transform_10(%arg0: i32) -> (i32, i32) {
    %c0_i32 = arith.constant 0 : i32
    %c0_i32_0 = arith.constant 0 : i32
    %c0_i32_1 = arith.constant 0 : i32
    return %c0_i32, %c0_i32_0 : i32, i32
  }
  func.func @transform_11(%arg0: i32) -> (i32, i32) {
    %c0_i32 = arith.constant 0 : i32
    %c0_i32_0 = arith.constant 0 : i32
    %c0_i32_1 = arith.constant 0 : i32
    return %c0_i32, %c0_i32_0 : i32, i32
  }
  func.func @transform_12(%arg0: i32) -> (i32, i32) {
    %c0_i32 = arith.constant 0 : i32
    %c0_i32_0 = arith.constant 0 : i32
    %c0_i32_1 = arith.constant 0 : i32
    return %c0_i32, %c0_i32_0 : i32, i32
  }
  func.func @transform_13(%arg0: i32) -> (i32, i32, i32) {
    %c0_i32 = arith.constant 0 : i32
    %c0_i32_0 = arith.constant 0 : i32
    %c0_i32_1 = arith.constant 0 : i32
    %c0_i32_2 = arith.constant 0 : i32
    return %c0_i32, %c0_i32_0, %c0_i32_1 : i32, i32, i32
  }
}

</mosaic_0001>

<llo_original>
// kernel: tpu_custom_call.1
$region0: #{tpu_custom_call.1}
  #allocation0 [shape = 'u32[]', space=smem, size = 0x4, offset = 0x4, fixed_abs, tag = 'smem constant byte address 0x4 - core index']
  #allocation1 [shape = 'u32[144,128]{1,0:T(1,128)}', space=vmem, size = 0x12000, scoped, tag = 'internal scratch']
  %s0 = inlined_call_operand.hbm [shape: f32[2,16,256], index: 0, kind: input, shape index: {}]
  %s1 = inlined_call_operand.vmem [shape: f32[1,256], index: 1, kind: input, shape index: {}]
  %s2 = inlined_call_operand.vmem [shape: f32[1,256], index: 2, kind: input, shape index: {}]
  %s3 = inlined_call_operand.hbm [shape: bf16[768,256], index: 3, kind: input, shape index: {}]
  %s4 = inlined_call_operand.vmem [shape: f32[1,256], index: 4, kind: input, shape index: {}]
  %s5 = inlined_call_operand.vmem [shape: f32[1,256], index: 5, kind: input, shape index: {}]
  %s6 = inlined_call_operand.vmem [shape: f32[1,256], index: 6, kind: input, shape index: {}]
  %s7 = inlined_call_operand.hbm [shape: bf16[768,256], index: 7, kind: input, shape index: {}]
  %s8 = inlined_call_operand.vmem [shape: f32[1,256], index: 8, kind: input, shape index: {}]
  %s9 = inlined_call_operand.vmem [shape: f32[16,4], index: 9, kind: input, shape index: {}]
  %s10 = inlined_call_operand.vmem [shape: f32[1,4], index: 10, kind: input, shape index: {}]
  %s11 = inlined_call_operand.vmem [shape: f32[4,16], index: 11, kind: input, shape index: {}]
  %s12 = inlined_call_operand.vmem [shape: f32[1,16], index: 12, kind: input, shape index: {}]
  %s13 = inlined_call_operand.hbm [shape: f32[2,16,256], index: 13, kind: output, shape index: {}]
  %s14 = sld [smem:[#allocation0]]
  $region74: #{tpu_custom_call.1} parent=0
    _
  %s16 = ssub.s32 1, %s14
  %s17 = scalar_select 0, %s16, %s14
  $region1: #{tpu_custom_call.1} parent=0
    #allocation2 [shape = 'u8[32768]{0}', space=vmem, size = 0x8000, scoped, tag = 'input window, operand 0, single buffered']
    #allocation3 [shape = 's32[1]{0}', space=sflag, size = 0x4, scoped, tag = 'scoped memory for tpu_custom_call.1']
    #allocation4 [shape = 's32[1]{0}', space=sflag, size = 0x4, scoped, tag = 'scoped memory for tpu_custom_call.1']
    #allocation5 [shape = 'u8[393216]{0}', space=vmem, size = 0x60000, scoped, tag = 'input window, operand 3, single buffered']
    #allocation6 [shape = 's32[1]{0}', space=sflag, size = 0x4, scoped, tag = 'scoped memory for tpu_custom_call.1']
    #allocation7 [shape = 'u8[393216]{0}', space=vmem, size = 0x60000, scoped, tag = 'input window, operand 7, single buffered']
    #allocation8 [shape = 'u8[32768]{0}', space=vmem, size = 0x8000, scoped, tag = 'output window, operand 0, single buffered']
    %18 = vsyncpa [#allocation3], 0
    %19 = vsyncpa [#allocation6], 0
    %20 = vsyncpa [#allocation4], 0
    // Predicated region
    $region2: #{tpu_custom_call.1} parent=1 // pred_check
      _
    $region3: #{tpu_custom_call.1} parent=1 // pred_check_branch
      %22 = sbr.rel (0) target = $region5
    $region4: #{tpu_custom_call.1} parent=1 // pred_region
      %s24 = ssub.s32 1024, 1024
      %25 = vsyncadd [#allocation3], %s24
      %s26 = sshll.u32 [#allocation2], 4
      %s27 = int_to_ptr.vmem [resolvable:$true] %s26
      %32 = dma.hbm_to_vmem [thread:$0]  %s0, 1024, %s27, [#allocation3], 256, 256, 16
    $region5: #{tpu_custom_call.1} parent=1 // pred_fallthru
      _
    // Predicated region
    $region6: #{tpu_custom_call.1} parent=1 // pred_check
      _
    $region7: #{tpu_custom_call.1} parent=1 // pred_check_branch
      %34 = sbr.rel (0) target = $region9
    $region8: #{tpu_custom_call.1} parent=1 // pred_region
      _
    $region9: #{tpu_custom_call.1} parent=1 // pred_fallthru
      _
    // Predicated region
    $region10: #{tpu_custom_call.1} parent=1 // pred_check
      _
    $region11: #{tpu_custom_call.1} parent=1 // pred_check_branch
      %36 = sbr.rel (0) target = $region13
    $region12: #{tpu_custom_call.1} parent=1 // pred_region
      _
    $region13: #{tpu_custom_call.1} parent=1 // pred_fallthru
      _
    // Predicated region
    $region14: #{tpu_custom_call.1} parent=1 // pred_check
      _
    $region15: #{tpu_custom_call.1} parent=1 // pred_check_branch
      %38 = sbr.rel (0) target = $region17
    $region16: #{tpu_custom_call.1} parent=1 // pred_region
      %s40 = ssub.s32 12288, 12288
      %41 = vsyncadd [#allocation6], %s40
      %s42 = sshll.u32 [#allocation5], 4
      %s43 = int_to_ptr.vmem [resolvable:$true] %s42
      %48 = dma.hbm_to_vmem [thread:$0]  %s3, 12288, %s43, [#allocation6], 128, 128, 8
    $region17: #{tpu_custom_call.1} parent=1 // pred_fallthru
      _
    // Predicated region
    $region18: #{tpu_custom_call.1} parent=1 // pred_check
      _
    $region19: #{tpu_custom_call.1} parent=1 // pred_check_branch
      %50 = sbr.rel (0) target = $region21
    $region20: #{tpu_custom_call.1} parent=1 // pred_region
      _
    $region21: #{tpu_custom_call.1} parent=1 // pred_fallthru
      _
    // Predicated region
    $region22: #{tpu_custom_call.1} parent=1 // pred_check
      _
    $region23: #{tpu_custom_call.1} parent=1 // pred_check_branch
      %52 = sbr.rel (0) target = $region25
    $region24: #{tpu_custom_call.1} parent=1 // pred_region
      _
    $region25: #{tpu_custom_call.1} parent=1 // pred_fallthru
      _
    // Predicated region
    $region26: #{tpu_custom_call.1} parent=1 // pred_check
      _
    $region27: #{tpu_custom_call.1} parent=1 // pred_check_branch
      %54 = sbr.rel (0) target = $region29
    $region28: #{tpu_custom_call.1} parent=1 // pred_region
      _
    $region29: #{tpu_custom_call.1} parent=1 // pred_fallthru
      _
    // Predicated region
    $region30: #{tpu_custom_call.1} parent=1 // pred_check
      _
    $region31: #{tpu_custom_call.1} parent=1 // pred_check_branch
      %56 = sbr.rel (0) target = $region33
    $region32: #{tpu_custom_call.1} parent=1 // pred_region
      %s58 = ssub.s32 12288, 12288
      %59 = vsyncadd [#allocation6], %s58
      %s60 = sshll.u32 [#allocation7], 4
      %s61 = int_to_ptr.vmem [resolvable:$true] %s60
      %66 = dma.hbm_to_vmem [thread:$0]  %s7, 12288, %s61, [#allocation6], 128, 128, 8
    $region33: #{tpu_custom_call.1} parent=1 // pred_fallthru
      _
    // Predicated region
    $region34: #{tpu_custom_call.1} parent=1 // pred_check
      _
    $region35: #{tpu_custom_call.1} parent=1 // pred_check_branch
      %68 = sbr.rel (0) target = $region37
    $region36: #{tpu_custom_call.1} parent=1 // pred_region
      _
    $region37: #{tpu_custom_call.1} parent=1 // pred_fallthru
      _
    // Predicated region
    $region38: #{tpu_custom_call.1} parent=1 // pred_check
      _
    $region39: #{tpu_custom_call.1} parent=1 // pred_check_branch
      %70 = sbr.rel (0) target = $region41
    $region40: #{tpu_custom_call.1} parent=1 // pred_region
      _
    $region41: #{tpu_custom_call.1} parent=1 // pred_fallthru
      _
    // Predicated region
    $region42: #{tpu_custom_call.1} parent=1 // pred_check
      _
    $region43: #{tpu_custom_call.1} parent=1 // pred_check_branch
      %72 = sbr.rel (0) target = $region45
    $region44: #{tpu_custom_call.1} parent=1 // pred_region
      _
    $region45: #{tpu_custom_call.1} parent=1 // pred_fallthru
      _
    // Predicated region
    $region46: #{tpu_custom_call.1} parent=1 // pred_check
      _
    $region47: #{tpu_custom_call.1} parent=1 // pred_check_branch
      %74 = sbr.rel (0) target = $region49
    $region48: #{tpu_custom_call.1} parent=1 // pred_region
      _
    $region49: #{tpu_custom_call.1} parent=1 // pred_fallthru
      _
    // Predicated region
    $region50: #{tpu_custom_call.1} parent=1 // pred_check
      _
    $region51: #{tpu_custom_call.1} parent=1 // pred_check_branch
      %76 = sbr.rel (0) target = $region53
    $region52: #{tpu_custom_call.1} parent=1 // pred_region
      _
    $region53: #{tpu_custom_call.1} parent=1 // pred_fallthru
      _
    // Predicated region
    $region54: #{tpu_custom_call.1} parent=1 // pred_check
      _
    $region55: #{tpu_custom_call.1} parent=1 // pred_check_branch
      %78 = sbr.rel (0) target = $region57
    $region56: #{tpu_custom_call.1} parent=1 // pred_region
      %79 = dma.done [#allocation3], 1024
    $region57: #{tpu_custom_call.1} parent=1 // pred_fallthru
      _
    // Predicated region
    $region58: #{tpu_custom_call.1} parent=1 // pred_check
      _
    $region59: #{tpu_custom_call.1} parent=1 // pred_check_branch
      %81 = sbr.rel (0) target = $region61
    $region60: #{tpu_custom_call.1} parent=1 // pred_region
      %82 = dma.done [#allocation6], 12288
    $region61: #{tpu_custom_call.1} parent=1 // pred_fallthru
      _
    // Predicated region
    $region62: #{tpu_custom_call.1} parent=1 // pred_check
      _
    $region63: #{tpu_custom_call.1} parent=1 // pred_check_branch
      %84 = sbr.rel (0) target = $region65
    $region64: #{tpu_custom_call.1} parent=1 // pred_region
      %85 = dma.done [#allocation6], 12288
    $region65: #{tpu_custom_call.1} parent=1 // pred_fallthru
      _
    %v86 = vld [vmem:[#allocation2] sm:$0xff]
    %v87 = vld [vmem:[#allocation2 + $0x8] sm:$0xff]
    %v88 = vld [vmem:[#allocation2 + $0x10] sm:$0xff]
    %v89 = vld [vmem:[#allocation2 + $0x18] sm:$0xff]
    %v90 = vld [vmem:[#allocation2 + $0x20] sm:$0xff]
    %v91 = vld [vmem:[#allocation2 + $0x28] sm:$0xff]
    %v92 = vld [vmem:[#allocation2 + $0x30] sm:$0xff]
    %v93 = vld [vmem:[#allocation2 + $0x38] sm:$0xff]
    %v94 = vlaneseq
    %v95 = vshrl.u32 %v94, 7
    %v96 = vadd.s32 %v95, 8
    %v97 = vadd.s32 %v95, 16
    %v98 = vadd.s32 %v95, 24
    %vm99 = vcmp.lt.s32.totalorder %v95, 0
    %v100 = vsub.s32 0, %v95
    %v101 = vsel %vm99, %v100, %v95
    %v102 = vshrl.u32 %v101, 4
    %v103 = vand.u32 %v101, 15
    %v104 = vsub.s32 0, %v103
    %v105 = vsel %vm99, %v104, %v103
    %vm106 = vcmp.lt.s32.totalorder %v96, 0
    %v107 = vsub.s32 0, %v96
    %v108 = vsel %vm106, %v107, %v96
    %v109 = vshrl.u32 %v108, 4
    %v110 = vand.u32 %v108, 15
    %v111 = vsub.s32 0, %v110
    %v112 = vsel %vm106, %v111, %v110
    %vm113 = vcmp.lt.s32.totalorder %v97, 0
    %v114 = vsub.s32 0, %v97
    %v115 = vsel %vm113, %v114, %v97
    %v116 = vshrl.u32 %v115, 4
    %v117 = vand.u32 %v115, 15
    %v118 = vsub.s32 0, %v117
    %v119 = vsel %vm113, %v118, %v117
    %vm120 = vcmp.lt.s32.totalorder %v98, 0
    %v121 = vsub.s32 0, %v98
    %v122 = vsel %vm120, %v121, %v98
    %v123 = vshrl.u32 %v122, 4
    %v124 = vand.u32 %v122, 15
    %v125 = vsub.s32 0, %v124
    %v126 = vsel %vm120, %v125, %v124
    %vm127 = vcmp.ne.s32.totalorder %v105, 0
    %vm128 = vcmp.ne.s32.totalorder %v112, 0
    %vm129 = vcmp.ne.s32.totalorder %v119, 0
    %vm130 = vcmp.ne.s32.totalorder %v126, 0
    %vm131 = vcmp.lt.s32.totalorder %v105, 0
    %vm132 = vcmp.lt.s32.totalorder %v112, 0
    %vm133 = vcmp.lt.s32.totalorder %v119, 0
    %vm134 = vcmp.lt.s32.totalorder %v126, 0
    %vm135 = vmand %vm131, %vm127
    %vm136 = vmand %vm132, %vm128
    %vm137 = vmand %vm133, %vm129
    %vm138 = vmand %vm134, %vm130
    %v139 = vadd.s32 %v105, 16
    %v140 = vadd.s32 %v112, 16
    %v141 = vadd.s32 %v119, 16
    %v142 = vadd.s32 %v126, 16
    %v143 = vsel %vm135, %v139, %v105
    %v144 = vsel %vm136, %v140, %v112
    %v145 = vsel %vm137, %v141, %v119
    %v146 = vsel %vm138, %v142, %v126
    %vm147 = vcmp.ne.s32.totalorder %v143, 0
    %vm148 = vcmp.ne.s32.totalorder %v144, 0
    %vm149 = vcmp.ne.s32.totalorder %v145, 0
    %vm150 = vcmp.ne.s32.totalorder %v146, 0
    %vm151 = vcmp.ne.s32.totalorder %v143, 15
    %vm152 = vcmp.ne.s32.totalorder %v144, 15
    %vm153 = vcmp.ne.s32.totalorder %v145, 15
    %vm154 = vcmp.ne.s32.totalorder %v146, 15
    %v155 = vld [vmem:[%s1] sm:$0x3]
    %v156 = vld [vmem:[%s2] sm:$0x3]
    %v157 = vld [vmem:[%s4] sm:$0x3]
    %v158 = vadd.f32 %v86, %v88
    %v159 = vadd.f32 %v158, %v90
    %v160 = vadd.f32 %v159, %v92
    %v161 = vrot.slane %v160, 4
    %v162 = vadd.f32 %v160, %v161
    %v163 = vrot.slane %v162, 2
    %v164 = vadd.f32 %v162, %v163
    %v165 = vrot.slane %v164, 1
    %v166 = vadd.f32 %v164, %v165
    %v167 = vadd.f32 %v87, %v89
    %v168 = vadd.f32 %v167, %v91
    %v169 = vadd.f32 %v168, %v93
    %v170 = vrot.slane %v169, 4
    %v171 = vadd.f32 %v169, %v170
    %v172 = vrot.slane %v171, 2
    %v173 = vadd.f32 %v171, %v172
    %v174 = vrot.slane %v173, 1
    %v175 = vadd.f32 %v173, %v174
    %v176 = vmul.f32 %v86, %v86
    %v177 = vmul.f32 %v87, %v87
    %v178 = vmul.f32 %v88, %v88
    %v179 = vmul.f32 %v89, %v89
    %v180 = vmul.f32 %v90, %v90
    %v181 = vmul.f32 %v91, %v91
    %v182 = vmul.f32 %v92, %v92
    %v183 = vmul.f32 %v93, %v93
    %v184 = vadd.f32 %v176, %v178
    %v185 = vadd.f32 %v184, %v180
    %v186 = vadd.f32 %v185, %v182
    %v187 = vrot.slane %v186, 4
    %v188 = vadd.f32 %v186, %v187
    %v189 = vrot.slane %v188, 2
    %v190 = vadd.f32 %v188, %v189
    %v191 = vrot.slane %v190, 1
    %v192 = vadd.f32 %v190, %v191
    %v193 = vadd.f32 %v177, %v179
    %v194 = vadd.f32 %v193, %v181
    %v195 = vadd.f32 %v194, %v183
    %v196 = vrot.slane %v195, 4
    %v197 = vadd.f32 %v195, %v196
    %v198 = vrot.slane %v197, 2
    %v199 = vadd.f32 %v197, %v198
    %v200 = vrot.slane %v199, 1
    %v201 = vadd.f32 %v199, %v200
    %202 = vrot.lane.b32.xlu0 %v166, 16
    %v203 = vpop.permute.xlu0 %202
    %204 = vrot.lane.b32.xlu0 %v175, 16
    %v205 = vpop.permute.xlu0 %204
    %v206 = vlaneseq
    %v207 = vand.u32 %v206, 127
    %vm208 = vcmp.lt.s32.totalorder %v207, 16
    %v209 = vsel %vm208, %v203, %v205
    %v210 = vsel %vm208, %v205, %v203
    %v211 = vadd.f32 %v166, %v210
    %v212 = vadd.f32 %v175, %v209
    %213 = vrot.lane.b32.xlu0 %v192, 16
    %v214 = vpop.permute.xlu0 %213
    %215 = vrot.lane.b32.xlu0 %v201, 16
    %v216 = vpop.permute.xlu0 %215
    %v217 = vsel %vm208, %v214, %v216
    %v218 = vsel %vm208, %v216, %v214
    %v219 = vadd.f32 %v192, %v218
    %v220 = vadd.f32 %v201, %v217
    %221 = vrot.lane.b32.xlu0 %v211, 32
    %v222 = vpop.permute.xlu0 %221
    %223 = vrot.lane.b32.xlu0 %v212, 32
    %v224 = vpop.permute.xlu0 %223
    %vm225 = vcmp.lt.s32.totalorder %v207, 32
    %v226 = vsel %vm225, %v222, %v224
    %v227 = vsel %vm225, %v224, %v222
    %v228 = vadd.f32 %v211, %v227
    %v229 = vadd.f32 %v212, %v226
    %230 = vrot.lane.b32.xlu0 %v219, 32
    %v231 = vpop.permute.xlu0 %230
    %232 = vrot.lane.b32.xlu0 %v220, 32
    %v233 = vpop.permute.xlu0 %232
    %v234 = vsel %vm225, %v231, %v233
    %v235 = vsel %vm225, %v233, %v231
    %v236 = vadd.f32 %v219, %v235
    %v237 = vadd.f32 %v220, %v234
    %238 = vrot.lane.b32.xlu0 %v228, 64
    %v239 = vpop.permute.xlu0 %238
    %240 = vrot.lane.b32.xlu0 %v229, 64
    %v241 = vpop.permute.xlu0 %240
    %vm242 = vcmp.lt.s32.totalorder %v207, 64
    %v243 = vsel %vm242, %v239, %v241
    %v244 = vsel %vm242, %v241, %v239
    %v245 = vadd.f32 %v228, %v244
    %v246 = vadd.f32 %v229, %v243
    %247 = vrot.lane.b32.xlu0 %v236, 64
    %v248 = vpop.permute.xlu0 %247
    %249 = vrot.lane.b32.xlu0 %v237, 64
    %v250 = vpop.permute.xlu0 %249
    %v251 = vsel %vm242, %v248, %v250
    %v252 = vsel %vm242, %v250, %v248
    %v253 = vadd.f32 %v236, %v252
    %v254 = vadd.f32 %v237, %v251
    %v255 = vadd.f32 %v245, %v246
    %v256 = vadd.f32 %v253, %v254
    %v257 = vrcp.pop 512.0
    %v258 = vmul.f32 %v255, %v257
    %v259 = vmul.f32 %v256, %v257
    %v260 = vmul.f32 %v258, %v258
    %v261 = vsub.f32 %v259, %v260
    %v262 = vadd.f32 %v261, 1e-05
    %v263 = vrsqrt.pop %v262
    %v265 = vcombine.low %v263, %v263
    %v267 = vunpack.c.l.s4 1966171168
    %v268 = vunpack.c.0.s8 %v267
    %v269 = vlaneseq
    %v270 = vshrl.u32 %v269, 7
    %v271 = vsub.s32 %v268, %v270
    %v272 = vrot.slane %v265, %v271
    %v274 = vunpack.c.l.s4 1966171168
    %v275 = vunpack.c.0.s8 %v274
    %v276 = vlaneseq
    %v277 = vshrl.u32 %v276, 7
    %v278 = vsub.s32 %v275, %v277
    %v279 = vrot.slane %v272, %v278
    %v281 = vmul.f32 %v155, %v279
    %v283 = vlaneseq
    %v284 = vshrl.u32 %v283, 7
    %v285 = vsub.s32 0, %v284
    %v286 = vrot.slane %v281, %v285
    %v287 = vlaneseq
    %v288 = vshrl.u32 %v287, 7
    %v289 = vsub.s32 1, %v288
    %v290 = vrot.slane %v281, %v289
    %v293 = vmul.f32 %v258, %v286
    %v294 = vmul.f32 %v258, %v290
    %v297 = vcombine.low %v293, %v294
    %v299 = vunpack.c.l.s4 1966171168
    %v300 = vunpack.c.0.s8 %v299
    %v301 = vlaneseq
    %v302 = vshrl.u32 %v301, 7
    %v303 = vsub.s32 %v300, %v302
    %v304 = vrot.slane %v297, %v303
    %v306 = vunpack.c.l.s4 1966171168
    %v307 = vunpack.c.0.s8 %v306
    %v308 = vlaneseq
    %v309 = vshrl.u32 %v308, 7
    %v310 = vsub.s32 %v307, %v309
    %v311 = vrot.slane %v304, %v310
    %v313 = vsub.f32 %v156, %v311
    %v314 = vmul.f32 %v86, %v286
    %v315 = vmul.f32 %v87, %v290
    %v316 = vmul.f32 %v88, %v286
    %v317 = vmul.f32 %v89, %v290
    %v318 = vmul.f32 %v90, %v286
    %v319 = vmul.f32 %v91, %v290
    %v320 = vmul.f32 %v92, %v286
    %v321 = vmul.f32 %v93, %v290
    %v323 = vlaneseq
    %v324 = vshrl.u32 %v323, 7
    %v325 = vsub.s32 0, %v324
    %v326 = vrot.slane %v313, %v325
    %v327 = vlaneseq
    %v328 = vshrl.u32 %v327, 7
    %v329 = vsub.s32 1, %v328
    %v330 = vrot.slane %v313, %v329
    %v333 = vadd.f32 %v314, %v326
    %v334 = vadd.f32 %v315, %v330
    %v335 = vadd.f32 %v316, %v326
    %v336 = vadd.f32 %v317, %v330
    %v337 = vadd.f32 %v318, %v326
    %v338 = vadd.f32 %v319, %v330
    %v339 = vadd.f32 %v320, %v326
    %v340 = vadd.f32 %v321, %v330
    %v341 = vxor.u32 %v333, 2147483648
    %v342 = vxor.u32 %v334, 2147483648
    %v343 = vxor.u32 %v335, 2147483648
    %v344 = vxor.u32 %v336, 2147483648
    %v345 = vxor.u32 %v337, 2147483648
    %v346 = vxor.u32 %v338, 2147483648
    %v347 = vxor.u32 %v339, 2147483648
    %v348 = vxor.u32 %v340, 2147483648
    %v349 = vmul.f32 %v341, 1.442695
    %v350 = vpow.pop %v349
    %v351 = vmul.f32 %v342, 1.442695
    %v352 = vpow.pop %v351
    %v353 = vmul.f32 %v343, 1.442695
    %v354 = vpow.pop %v353
    %v355 = vmul.f32 %v344, 1.442695
    %v356 = vpow.pop %v355
    %v357 = vmul.f32 %v345, 1.442695
    %v358 = vpow.pop %v357
    %v359 = vmul.f32 %v346, 1.442695
    %v360 = vpow.pop %v359
    %v361 = vmul.f32 %v347, 1.442695
    %v362 = vpow.pop %v361
    %v363 = vmul.f32 %v348, 1.442695
    %v364 = vpow.pop %v363
    %v365 = vadd.f32 %v350, 1.0
    %v366 = vadd.f32 %v352, 1.0
    %v367 = vadd.f32 %v354, 1.0
    %v368 = vadd.f32 %v356, 1.0
    %v369 = vadd.f32 %v358, 1.0
    %v370 = vadd.f32 %v360, 1.0
    %v371 = vadd.f32 %v362, 1.0
    %v372 = vadd.f32 %v364, 1.0
    %v373 = vrcp.pop %v365
    %v374 = vmul.f32 1.0, %v373
    %v375 = vrcp.pop %v366
    %v376 = vmul.f32 1.0, %v375
    %v377 = vrcp.pop %v367
    %v378 = vmul.f32 1.0, %v377
    %v379 = vrcp.pop %v368
    %v380 = vmul.f32 1.0, %v379
    %v381 = vrcp.pop %v369
    %v382 = vmul.f32 1.0, %v381
    %v383 = vrcp.pop %v370
    %v384 = vmul.f32 1.0, %v383
    %v385 = vrcp.pop %v371
    %v386 = vmul.f32 1.0, %v385
    %v387 = vrcp.pop %v372
    %v388 = vmul.f32 1.0, %v387
    %v389 = vmul.f32 %v333, %v374
    %v390 = vmul.f32 %v334, %v376
    %v391 = vmul.f32 %v335, %v378
    %v392 = vmul.f32 %v336, %v380
    %v393 = vmul.f32 %v337, %v382
    %v394 = vmul.f32 %v338, %v384
    %v395 = vmul.f32 %v339, %v386
    %v396 = vmul.f32 %v340, %v388
    %v397 = vrot.slane %v389, 7
    %v398 = vrot.slane %v390, 7
    %v399 = vrot.slane %v391, 7
    %v400 = vrot.slane %v392, 7
    %v401 = vrot.slane %v393, 7
    %v402 = vrot.slane %v394, 7
    %v403 = vrot.slane %v395, 7
    %v404 = vrot.slane %v396, 7
    %vm405 = vcmp.lt.s32.totalorder %v95, 1
    %v406 = vsel %vm405, %v401, %v403
    %v407 = vsel %vm405, %v402, %v404
    %v408 = vsel %vm405, %v399, %v401
    %v409 = vsel %vm405, %v400, %v402
    %v410 = vsel %vm405, %v397, %v399
    %v411 = vsel %vm405, %v398, %v400
    %v412 = vsel %vm405, %v403, %v397
    %v413 = vsel %vm405, %v404, %v398
    %v414 = vsel %vm147, 1, 0
    %v415 = vsel %vm148, 1, 0
    %v416 = vsel %vm149, 1, 0
    %v417 = vsel %vm150, 1, 0
    %vm418 = vcmp.eq.s32.totalorder %v414, 1
    %vm419 = vcmp.eq.s32.totalorder %v415, 1
    %vm420 = vcmp.eq.s32.totalorder %v416, 1
    %vm421 = vcmp.eq.s32.totalorder %v417, 1
    %v422 = vsel %vm418, %v412, 0.0
    %v423 = vsel %vm418, %v413, 0.0
    %v424 = vsel %vm419, %v410, 0.0
    %v425 = vsel %vm419, %v411, 0.0
    %v426 = vsel %vm420, %v408, 0.0
    %v427 = vsel %vm420, %v409, 0.0
    %v428 = vsel %vm421, %v406, 0.0
    %v429 = vsel %vm421, %v407, 0.0
    %v430 = vrot.slane %v389, 1
    %v431 = vrot.slane %v390, 1
    %v432 = vrot.slane %v391, 1
    %v433 = vrot.slane %v392, 1
    %v434 = vrot.slane %v393, 1
    %v435 = vrot.slane %v394, 1
    %v436 = vrot.slane %v395, 1
    %v437 = vrot.slane %v396, 1
    %vm438 = vcmp.lt.s32.totalorder %v95, 7
    %v439 = vsel %vm438, %v434, %v436
    %v440 = vsel %vm438, %v435, %v437
    %v441 = vsel %vm438, %v432, %v434
    %v442 = vsel %vm438, %v433, %v435
    %v443 = vsel %vm438, %v430, %v432
    %v444 = vsel %vm438, %v431, %v433
    %v445 = vsel %vm438, %v436, %v430
    %v446 = vsel %vm438, %v437, %v431
    %v447 = vsel %vm151, 1, 0
    %v448 = vsel %vm152, 1, 0
    %v449 = vsel %vm153, 1, 0
    %v450 = vsel %vm154, 1, 0
    %vm451 = vcmp.eq.s32.totalorder %v447, 1
    %vm452 = vcmp.eq.s32.totalorder %v448, 1
    %vm453 = vcmp.eq.s32.totalorder %v449, 1
    %vm454 = vcmp.eq.s32.totalorder %v450, 1
    %v455 = vsel %vm451, %v443, 0.0
    %v456 = vsel %vm451, %v444, 0.0
    %v457 = vsel %vm452, %v441, 0.0
    %v458 = vsel %vm452, %v442, 0.0
    %v459 = vsel %vm453, %v439, 0.0
    %v460 = vsel %vm453, %v440, 0.0
    %v461 = vsel %vm454, %v445, 0.0
    %v462 = vsel %vm454, %v446, 0.0
    %v463 = vpack.c.bf16 %v424, %v422
    %v464 = vpack.c.bf16 %v425, %v423
    %v465 = vpack.c.bf16 %v391, %v389
    %v466 = vpack.c.bf16 %v392, %v390
    %v467 = vpack.c.bf16 %v457, %v455
    %v468 = vpack.c.bf16 %v458, %v456
    %v469 = vpack.c.bf16 %v428, %v426
    %v470 = vpack.c.bf16 %v429, %v427
    %v471 = vpack.c.bf16 %v395, %v393
    %v472 = vpack.c.bf16 %v396, %v394
    %v473 = vpack.c.bf16 %v461, %v459
    %v474 = vpack.c.bf16 %v462, %v460
    %v475 = vld [vmem:[#allocation5] sm:$0xff]
    %v476 = vld [vmem:[#allocation5 + $0x8] sm:$0xff]
    %v477 = vld [vmem:[#allocation5 + $0x10] sm:$0xff]
    %v478 = vld [vmem:[#allocation5 + $0x18] sm:$0xff]
    %v479 = vld [vmem:[#allocation5 + $0x20] sm:$0xff]
    %v480 = vld [vmem:[#allocation5 + $0x28] sm:$0xff]
    %v481 = vld [vmem:[#allocation5 + $0x30] sm:$0xff]
    %v482 = vld [vmem:[#allocation5 + $0x38] sm:$0xff]
    %v483 = vld [vmem:[#allocation5 + $0x40] sm:$0xff]
    %v484 = vld [vmem:[#allocation5 + $0x48] sm:$0xff]
    %v485 = vld [vmem:[#allocation5 + $0x50] sm:$0xff]
    %v486 = vld [vmem:[#allocation5 + $0x58] sm:$0xff]
    %v487 = vld [vmem:[#allocation5 + $0x60] sm:$0xff]
    %v488 = vld [vmem:[#allocation5 + $0x68] sm:$0xff]
    %v489 = vld [vmem:[#allocation5 + $0x70] sm:$0xff]
    %v490 = vld [vmem:[#allocation5 + $0x78] sm:$0xff]
    %v491 = vld [vmem:[#allocation5 + $0x80] sm:$0xff]
    %v492 = vld [vmem:[#allocation5 + $0x88] sm:$0xff]
    %v493 = vld [vmem:[#allocation5 + $0x90] sm:$0xff]
    %v494 = vld [vmem:[#allocation5 + $0x98] sm:$0xff]
    %v495 = vld [vmem:[#allocation5 + $0xa0] sm:$0xff]
    %v496 = vld [vmem:[#allocation5 + $0xa8] sm:$0xff]
    %v497 = vld [vmem:[#allocation5 + $0xb0] sm:$0xff]
    %v498 = vld [vmem:[#allocation5 + $0xb8] sm:$0xff]
    %v499 = vld [vmem:[#allocation5 + $0xc0] sm:$0xff]
    %v500 = vld [vmem:[#allocation5 + $0xc8] sm:$0xff]
    %v501 = vld [vmem:[#allocation5 + $0xd0] sm:$0xff]
    %v502 = vld [vmem:[#allocation5 + $0xd8] sm:$0xff]
    %v503 = vld [vmem:[#allocation5 + $0xe0] sm:$0xff]
    %v504 = vld [vmem:[#allocation5 + $0xe8] sm:$0xff]
    %v505 = vld [vmem:[#allocation5 + $0xf0] sm:$0xff]
    %v506 = vld [vmem:[#allocation5 + $0xf8] sm:$0xff]
    %v507 = vld [vmem:[#allocation5 + $0x100] sm:$0xff]
    %v508 = vld [vmem:[#allocation5 + $0x108] sm:$0xff]
    %v509 = vld [vmem:[#allocation5 + $0x110] sm:$0xff]
    %v510 = vld [vmem:[#allocation5 + $0x118] sm:$0xff]
    %v511 = vld [vmem:[#allocation5 + $0x120] sm:$0xff]
    %v512 = vld [vmem:[#allocation5 + $0x128] sm:$0xff]
    %v513 = vld [vmem:[#allocation5 + $0x130] sm:$0xff]
    %v514 = vld [vmem:[#allocation5 + $0x138] sm:$0xff]
    %v515 = vld [vmem:[#allocation5 + $0x140] sm:$0xff]
    %v516 = vld [vmem:[#allocation5 + $0x148] sm:$0xff]
    %v517 = vld [vmem:[#allocation5 + $0x150] sm:$0xff]
    %v518 = vld [vmem:[#allocation5 + $0x158] sm:$0xff]
    %v519 = vld [vmem:[#allocation5 + $0x160] sm:$0xff]
    %v520 = vld [vmem:[#allocation5 + $0x168] sm:$0xff]
    %v521 = vld [vmem:[#allocation5 + $0x170] sm:$0xff]
    %v522 = vld [vmem:[#allocation5 + $0x178] sm:$0xff]
    %v523 = vld [vmem:[#allocation5 + $0x180] sm:$0xff]
    %v524 = vld [vmem:[#allocation5 + $0x188] sm:$0xff]
    %v525 = vld [vmem:[#allocation5 + $0x190] sm:$0xff]
    %v526 = vld [vmem:[#allocation5 + $0x198] sm:$0xff]
    %v527 = vld [vmem:[#allocation5 + $0x1a0] sm:$0xff]
    %v528 = vld [vmem:[#allocation5 + $0x1a8] sm:$0xff]
    %v529 = vld [vmem:[#allocation5 + $0x1b0] sm:$0xff]
    %v530 = vld [vmem:[#allocation5 + $0x1b8] sm:$0xff]
    %v531 = vld [vmem:[#allocation5 + $0x1c0] sm:$0xff]
    %v532 = vld [vmem:[#allocation5 + $0x1c8] sm:$0xff]
    %v533 = vld [vmem:[#allocation5 + $0x1d0] sm:$0xff]
    %v534 = vld [vmem:[#allocation5 + $0x1d8] sm:$0xff]
    %v535 = vld [vmem:[#allocation5 + $0x1e0] sm:$0xff]
    %v536 = vld [vmem:[#allocation5 + $0x1e8] sm:$0xff]
    %v537 = vld [vmem:[#allocation5 + $0x1f0] sm:$0xff]
    %v538 = vld [vmem:[#allocation5 + $0x1f8] sm:$0xff]
    %v539 = vld [vmem:[#allocation5 + $0x200] sm:$0xff]
    %v540 = vld [vmem:[#allocation5 + $0x208] sm:$0xff]
    %v541 = vld [vmem:[#allocation5 + $0x210] sm:$0xff]
    %v542 = vld [vmem:[#allocation5 + $0x218] sm:$0xff]
    %v543 = vld [vmem:[#allocation5 + $0x220] sm:$0xff]
    %v544 = vld [vmem:[#allocation5 + $0x228] sm:$0xff]
    %v545 = vld [vmem:[#allocation5 + $0x230] sm:$0xff]
    %v546 = vld [vmem:[#allocation5 + $0x238] sm:$0xff]
    %v547 = vld [vmem:[#allocation5 + $0x240] sm:$0xff]
    %v548 = vld [vmem:[#allocation5 + $0x248] sm:$0xff]
    %v549 = vld [vmem:[#allocation5 + $0x250] sm:$0xff]
    %v550 = vld [vmem:[#allocation5 + $0x258] sm:$0xff]
    %v551 = vld [vmem:[#allocation5 + $0x260] sm:$0xff]
    %v552 = vld [vmem:[#allocation5 + $0x268] sm:$0xff]
    %v553 = vld [vmem:[#allocation5 + $0x270] sm:$0xff]
    %v554 = vld [vmem:[#allocation5 + $0x278] sm:$0xff]
    %v555 = vld [vmem:[#allocation5 + $0x280] sm:$0xff]
    %v556 = vld [vmem:[#allocation5 + $0x288] sm:$0xff]
    %v557 = vld [vmem:[#allocation5 + $0x290] sm:$0xff]
    %v558 = vld [vmem:[#allocation5 + $0x298] sm:$0xff]
    %v559 = vld [vmem:[#allocation5 + $0x2a0] sm:$0xff]
    %v560 = vld [vmem:[#allocation5 + $0x2a8] sm:$0xff]
    %v561 = vld [vmem:[#allocation5 + $0x2b0] sm:$0xff]
    %v562 = vld [vmem:[#allocation5 + $0x2b8] sm:$0xff]
    %v563 = vld [vmem:[#allocation5 + $0x2c0] sm:$0xff]
    %v564 = vld [vmem:[#allocation5 + $0x2c8] sm:$0xff]
    %v565 = vld [vmem:[#allocation5 + $0x2d0] sm:$0xff]
    %v566 = vld [vmem:[#allocation5 + $0x2d8] sm:$0xff]
    %v567 = vld [vmem:[#allocation5 + $0x2e0] sm:$0xff]
    %v568 = vld [vmem:[#allocation5 + $0x2e8] sm:$0xff]
    %v569 = vld [vmem:[#allocation5 + $0x2f0] sm:$0xff]
    %v570 = vld [vmem:[#allocation5 + $0x2f8] sm:$0xff]
    %v572 = vlaneseq
    %v573 = vshrl.u32 %v572, 7
    %v574 = vsub.s32 0, %v573
    %v575 = vrot.slane %v157, %v574
    %v576 = vlaneseq
    %v577 = vshrl.u32 %v576, 7
    %v578 = vsub.s32 1, %v577
    %v579 = vrot.slane %v157, %v578
    %v678 = vunpack.c.l.b16 %v475
    %v679 = vunpack.c.h.b16 %v475
    %v680 = vunpack.c.l.b16 %v476
    %v681 = vunpack.c.h.b16 %v476
    %v682 = vunpack.c.l.b16 %v477
    %v683 = vunpack.c.h.b16 %v477
    %v684 = vunpack.c.l.b16 %v478
    %v685 = vunpack.c.h.b16 %v478
    %v686 = vunpack.c.l.b16 %v479
    %v687 = vunpack.c.h.b16 %v479
    %v688 = vunpack.c.l.b16 %v480
    %v689 = vunpack.c.h.b16 %v480
    %v690 = vunpack.c.l.b16 %v481
    %v691 = vunpack.c.h.b16 %v481
    %v692 = vunpack.c.l.b16 %v482
    %v693 = vunpack.c.h.b16 %v482
    %v694 = vunpack.c.l.b16 %v483
    %v695 = vunpack.c.h.b16 %v483
    %v696 = vunpack.c.l.b16 %v484
    %v697 = vunpack.c.h.b16 %v484
    %v698 = vunpack.c.l.b16 %v485
    %v699 = vunpack.c.h.b16 %v485
    %v700 = vunpack.c.l.b16 %v486
    %v701 = vunpack.c.h.b16 %v486
    %v702 = vunpack.c.l.b16 %v487
    %v703 = vunpack.c.h.b16 %v487
    %v704 = vunpack.c.l.b16 %v488
    %v705 = vunpack.c.h.b16 %v488
    %v706 = vunpack.c.l.b16 %v489
    %v707 = vunpack.c.h.b16 %v489
    %v708 = vunpack.c.l.b16 %v490
    %v709 = vunpack.c.h.b16 %v490
    %v710 = vunpack.c.l.b16 %v491
    %v711 = vunpack.c.h.b16 %v491
    %v712 = vunpack.c.l.b16 %v492
    %v713 = vunpack.c.h.b16 %v492
    %v714 = vunpack.c.l.b16 %v493
    %v715 = vunpack.c.h.b16 %v493
    %v716 = vunpack.c.l.b16 %v494
    %v717 = vunpack.c.h.b16 %v494
    %v718 = vunpack.c.l.b16 %v495
    %v719 = vunpack.c.h.b16 %v495
    %v720 = vunpack.c.l.b16 %v496
    %v721 = vunpack.c.h.b16 %v496
    %v722 = vunpack.c.l.b16 %v497
    %v723 = vunpack.c.h.b16 %v497
    %v724 = vunpack.c.l.b16 %v498
    %v725 = vunpack.c.h.b16 %v498
    %v726 = vunpack.c.l.b16 %v499
    %v727 = vunpack.c.h.b16 %v499
    %v728 = vunpack.c.l.b16 %v500
    %v729 = vunpack.c.h.b16 %v500
    %v730 = vunpack.c.l.b16 %v501
    %v731 = vunpack.c.h.b16 %v501
    %v732 = vunpack.c.l.b16 %v502
    %v733 = vunpack.c.h.b16 %v502
    %v734 = vunpack.c.l.b16 %v503
    %v735 = vunpack.c.h.b16 %v503
    %v736 = vunpack.c.l.b16 %v504
    %v737 = vunpack.c.h.b16 %v504
    %v738 = vunpack.c.l.b16 %v505
    %v739 = vunpack.c.h.b16 %v505
    %v740 = vunpack.c.l.b16 %v506
    %v741 = vunpack.c.h.b16 %v506
    %v742 = vunpack.c.l.b16 %v507
    %v743 = vunpack.c.h.b16 %v507
    %v744 = vunpack.c.l.b16 %v508
    %v745 = vunpack.c.h.b16 %v508
    %v746 = vunpack.c.l.b16 %v509
    %v747 = vunpack.c.h.b16 %v509
    %v748 = vunpack.c.l.b16 %v510
    %v749 = vunpack.c.h.b16 %v510
    %v750 = vunpack.c.l.b16 %v511
    %v751 = vunpack.c.h.b16 %v511
    %v752 = vunpack.c.l.b16 %v512
    %v753 = vunpack.c.h.b16 %v512
    %v754 = vunpack.c.l.b16 %v513
    %v755 = vunpack.c.h.b16 %v513
    %v756 = vunpack.c.l.b16 %v514
    %v757 = vunpack.c.h.b16 %v514
    %v758 = vunpack.c.l.b16 %v515
    %v759 = vunpack.c.h.b16 %v515
    %v760 = vunpack.c.l.b16 %v516
    %v761 = vunpack.c.h.b16 %v516
    %v762 = vunpack.c.l.b16 %v517
    %v763 = vunpack.c.h.b16 %v517
    %v764 = vunpack.c.l.b16 %v518
    %v765 = vunpack.c.h.b16 %v518
    %v766 = vunpack.c.l.b16 %v519
    %v767 = vunpack.c.h.b16 %v519
    %v768 = vunpack.c.l.b16 %v520
    %v769 = vunpack.c.h.b16 %v520
    %v770 = vunpack.c.l.b16 %v521
    %v771 = vunpack.c.h.b16 %v521
    %v772 = vunpack.c.l.b16 %v522
    %v773 = vunpack.c.h.b16 %v522
    %v774 = vunpack.c.l.b16 %v523
    %v775 = vunpack.c.h.b16 %v523
    %v776 = vunpack.c.l.b16 %v524
    %v777 = vunpack.c.h.b16 %v524
    %v778 = vunpack.c.l.b16 %v525
    %v779 = vunpack.c.h.b16 %v525
    %v780 = vunpack.c.l.b16 %v526
    %v781 = vunpack.c.h.b16 %v526
    %v782 = vunpack.c.l.b16 %v527
    %v783 = vunpack.c.h.b16 %v527
    %v784 = vunpack.c.l.b16 %v528
    %v785 = vunpack.c.h.b16 %v528
    %v786 = vunpack.c.l.b16 %v529
    %v787 = vunpack.c.h.b16 %v529
    %v788 = vunpack.c.l.b16 %v530
    %v789 = vunpack.c.h.b16 %v530
    %v790 = vunpack.c.l.b16 %v531
    %v791 = vunpack.c.h.b16 %v531
    %v792 = vunpack.c.l.b16 %v532
    %v793 = vunpack.c.h.b16 %v532
    %v794 = vunpack.c.l.b16 %v533
    %v795 = vunpack.c.h.b16 %v533
    %v796 = vunpack.c.l.b16 %v534
    %v797 = vunpack.c.h.b16 %v534
    %v798 = vunpack.c.l.b16 %v535
    %v799 = vunpack.c.h.b16 %v535
    %v800 = vunpack.c.l.b16 %v536
    %v801 = vunpack.c.h.b16 %v536
    %v802 = vunpack.c.l.b16 %v537
    %v803 = vunpack.c.h.b16 %v537
    %v804 = vunpack.c.l.b16 %v538
    %v805 = vunpack.c.h.b16 %v538
    %v806 = vunpack.c.l.b16 %v539
    %v807 = vunpack.c.h.b16 %v539
    %v808 = vunpack.c.l.b16 %v540
    %v809 = vunpack.c.h.b16 %v540
    %v810 = vunpack.c.l.b16 %v541
    %v811 = vunpack.c.h.b16 %v541
    %v812 = vunpack.c.l.b16 %v542
    %v813 = vunpack.c.h.b16 %v542
    %v814 = vunpack.c.l.b16 %v543
    %v815 = vunpack.c.h.b16 %v543
    %v816 = vunpack.c.l.b16 %v544
    %v817 = vunpack.c.h.b16 %v544
    %v818 = vunpack.c.l.b16 %v545
    %v819 = vunpack.c.h.b16 %v545
    %v820 = vunpack.c.l.b16 %v546
    %v821 = vunpack.c.h.b16 %v546
    %v822 = vunpack.c.l.b16 %v547
    %v823 = vunpack.c.h.b16 %v547
    %v824 = vunpack.c.l.b16 %v548
    %v825 = vunpack.c.h.b16 %v548
    %v826 = vunpack.c.l.b16 %v549
    %v827 = vunpack.c.h.b16 %v549
    %v828 = vunpack.c.l.b16 %v550
    %v829 = vunpack.c.h.b16 %v550
    %v830 = vunpack.c.l.b16 %v551
    %v831 = vunpack.c.h.b16 %v551
    %v832 = vunpack.c.l.b16 %v552
    %v833 = vunpack.c.h.b16 %v552
    %v834 = vunpack.c.l.b16 %v553
    %v835 = vunpack.c.h.b16 %v553
    %v836 = vunpack.c.l.b16 %v554
    %v837 = vunpack.c.h.b16 %v554
    %v838 = vunpack.c.l.b16 %v555
    %v839 = vunpack.c.h.b16 %v555
    %v840 = vunpack.c.l.b16 %v556
    %v841 = vunpack.c.h.b16 %v556
    %v842 = vunpack.c.l.b16 %v557
    %v843 = vunpack.c.h.b16 %v557
    %v844 = vunpack.c.l.b16 %v558
    %v845 = vunpack.c.h.b16 %v558
    %v846 = vunpack.c.l.b16 %v559
    %v847 = vunpack.c.h.b16 %v559
    %v848 = vunpack.c.l.b16 %v560
    %v849 = vunpack.c.h.b16 %v560
    %v850 = vunpack.c.l.b16 %v561
    %v851 = vunpack.c.h.b16 %v561
    %v852 = vunpack.c.l.b16 %v562
    %v853 = vunpack.c.h.b16 %v562
    %v854 = vunpack.c.l.b16 %v563
    %v855 = vunpack.c.h.b16 %v563
    %v856 = vunpack.c.l.b16 %v564
    %v857 = vunpack.c.h.b16 %v564
    %v858 = vunpack.c.l.b16 %v565
    %v859 = vunpack.c.h.b16 %v565
    %v860 = vunpack.c.l.b16 %v566
    %v861 = vunpack.c.h.b16 %v566
    %v862 = vunpack.c.l.b16 %v567
    %v863 = vunpack.c.h.b16 %v567
    %v864 = vunpack.c.l.b16 %v568
    %v865 = vunpack.c.h.b16 %v568
    %v866 = vunpack.c.l.b16 %v569
    %v867 = vunpack.c.h.b16 %v569
    %v868 = vunpack.c.l.b16 %v570
    %v869 = vunpack.c.h.b16 %v570
    %v870 = vpack.c.b16 %v680, %v678
    %v871 = vpack.c.b16 %v681, %v679
    %v872 = vpack.c.b16 %v684, %v682
    %v873 = vpack.c.b16 %v685, %v683
    %v874 = vpack.c.b16 %v688, %v686
    %v875 = vpack.c.b16 %v689, %v687
    %v876 = vpack.c.b16 %v692, %v690
    %v877 = vpack.c.b16 %v693, %v691
    %v878 = vpack.c.b16 %v696, %v694
    %v879 = vpack.c.b16 %v697, %v695
    %v880 = vpack.c.b16 %v700, %v698
    %v881 = vpack.c.b16 %v701, %v699
    %v882 = vpack.c.b16 %v704, %v702
    %v883 = vpack.c.b16 %v705, %v703
    %v884 = vpack.c.b16 %v708, %v706
    %v885 = vpack.c.b16 %v709, %v707
    %v886 = vpack.c.b16 %v712, %v710
    %v887 = vpack.c.b16 %v713, %v711
    %v888 = vpack.c.b16 %v716, %v714
    %v889 = vpack.c.b16 %v717, %v715
    %v890 = vpack.c.b16 %v720, %v718
    %v891 = vpack.c.b16 %v721, %v719
    %v892 = vpack.c.b16 %v724, %v722
    %v893 = vpack.c.b16 %v725, %v723
    %v894 = vpack.c.b16 %v728, %v726
    %v895 = vpack.c.b16 %v729, %v727
    %v896 = vpack.c.b16 %v732, %v730
    %v897 = vpack.c.b16 %v733, %v731
    %v898 = vpack.c.b16 %v736, %v734
    %v899 = vpack.c.b16 %v737, %v735
    %v900 = vpack.c.b16 %v740, %v738
    %v901 = vpack.c.b16 %v741, %v739
    %v902 = vpack.c.b16 %v744, %v742
    %v903 = vpack.c.b16 %v745, %v743
    %v904 = vpack.c.b16 %v748, %v746
    %v905 = vpack.c.b16 %v749, %v747
    %v906 = vpack.c.b16 %v752, %v750
    %v907 = vpack.c.b16 %v753, %v751
    %v908 = vpack.c.b16 %v756, %v754
    %v909 = vpack.c.b16 %v757, %v755
    %v910 = vpack.c.b16 %v760, %v758
    %v911 = vpack.c.b16 %v761, %v759
    %v912 = vpack.c.b16 %v764, %v762
    %v913 = vpack.c.b16 %v765, %v763
    %v914 = vpack.c.b16 %v768, %v766
    %v915 = vpack.c.b16 %v769, %v767
    %v916 = vpack.c.b16 %v772, %v770
    %v917 = vpack.c.b16 %v773, %v771
    %v918 = vpack.c.b16 %v776, %v774
    %v919 = vpack.c.b16 %v777, %v775
    %v920 = vpack.c.b16 %v780, %v778
    %v921 = vpack.c.b16 %v781, %v779
    %v922 = vpack.c.b16 %v784, %v782
    %v923 = vpack.c.b16 %v785, %v783
    %v924 = vpack.c.b16 %v788, %v786
    %v925 = vpack.c.b16 %v789, %v787
    %v926 = vpack.c.b16 %v792, %v790
    %v927 = vpack.c.b16 %v793, %v791
    %v928 = vpack.c.b16 %v796, %v794
    %v929 = vpack.c.b16 %v797, %v795
    %v930 = vpack.c.b16 %v800, %v798
    %v931 = vpack.c.b16 %v801, %v799
    %v932 = vpack.c.b16 %v804, %v802
    %v933 = vpack.c.b16 %v805, %v803
    %v934 = vpack.c.b16 %v808, %v806
    %v935 = vpack.c.b16 %v809, %v807
    %v936 = vpack.c.b16 %v812, %v810
    %v937 = vpack.c.b16 %v813, %v811
    %v938 = vpack.c.b16 %v816, %v814
    %v939 = vpack.c.b16 %v817, %v815
    %v940 = vpack.c.b16 %v820, %v818
    %v941 = vpack.c.b16 %v821, %v819
    %v942 = vpack.c.b16 %v824, %v822
    %v943 = vpack.c.b16 %v825, %v823
    %v944 = vpack.c.b16 %v828, %v826
    %v945 = vpack.c.b16 %v829, %v827
    %v946 = vpack.c.b16 %v832, %v830
    %v947 = vpack.c.b16 %v833, %v831
    %v948 = vpack.c.b16 %v836, %v834
    %v949 = vpack.c.b16 %v837, %v835
    %v950 = vpack.c.b16 %v840, %v838
    %v951 = vpack.c.b16 %v841, %v839
    %v952 = vpack.c.b16 %v844, %v842
    %v953 = vpack.c.b16 %v845, %v843
    %v954 = vpack.c.b16 %v848, %v846
    %v955 = vpack.c.b16 %v849, %v847
    %v956 = vpack.c.b16 %v852, %v850
    %v957 = vpack.c.b16 %v853, %v851
    %v958 = vpack.c.b16 %v856, %v854
    %v959 = vpack.c.b16 %v857, %v855
    %v960 = vpack.c.b16 %v860, %v858
    %v961 = vpack.c.b16 %v861, %v859
    %v962 = vpack.c.b16 %v864, %v862
    %v963 = vpack.c.b16 %v865, %v863
    %v964 = vpack.c.b16 %v868, %v866
    %v965 = vpack.c.b16 %v869, %v867
    %1062 = vmatprep.subr.bf16.mxu0 %v871
    %1063 = vmatpush1.bf16.msra.mxu0 %v870
    %1064 = vmatprep.subr.bf16.mxu0 %v873
    %1065 = vmatpush1.bf16.msra.mxu0 %v872
    %1066 = vmatprep.subr.bf16.mxu0 %v875
    %1067 = vmatpush1.bf16.msra.mxu0 %v874
    %1068 = vmatprep.subr.bf16.mxu0 %v877
    %1069 = vmatpush1.bf16.msra.mxu0 %v876
    %1070 = vmatprep.subr.bf16.mxu0 %v879
    %1071 = vmatpush1.bf16.msra.mxu0 %v878
    %1072 = vmatprep.subr.bf16.mxu0 %v881
    %1073 = vmatpush1.bf16.msra.mxu0 %v880
    %1074 = vmatprep.subr.bf16.mxu0 %v883
    %1075 = vmatpush1.bf16.msra.mxu0 %v882
    %1076 = vmatprep.subr.bf16.mxu0 %v885
    %1077 = vmatpush1.bf16.msra.mxu0 %v884
    %1078 = vmatprep.subr.bf16.mxu0 %v887
    %1079 = vmatpush1.bf16.msra.mxu0 %v886
    %1080 = vmatprep.subr.bf16.mxu0 %v889
    %1081 = vmatpush1.bf16.msra.mxu0 %v888
    %1082 = vmatprep.subr.bf16.mxu0 %v891
    %1083 = vmatpush1.bf16.msra.mxu0 %v890
    %1084 = vmatprep.subr.bf16.mxu0 %v893
    %1085 = vmatpush1.bf16.msra.mxu0 %v892
    %1086 = vmatprep.subr.bf16.mxu0 %v895
    %1087 = vmatpush1.bf16.msra.mxu0 %v894
    %1088 = vmatprep.subr.bf16.mxu0 %v897
    %1089 = vmatpush1.bf16.msra.mxu0 %v896
    %1090 = vmatprep.subr.bf16.mxu0 %v899
    %1091 = vmatpush1.bf16.msra.mxu0 %v898
    %1092 = vmatprep.subr.bf16.mxu0 %v901
    %1093 = vmatpush1.bf16.msra.mxu0 %v900
    %1094 = vmatprep.mubr.bf16.mxu0 %v464
    %1095 = vmatmul.mubr.bf16.gmra.mrb[0].mxu0 %v463
    %v1096 = vpop.f32.mrb[0].mxu0
    %v1097 = vadd.f32 %v575, %v1096
    %v1098 = vpop.f32.mrb[0].mxu0
    %v1099 = vadd.f32 %v579, %v1098
    %v1100 = vpop.f32.mrb[0].mxu0
    %v1101 = vadd.f32 %v575, %v1100
    %v1102 = vpop.f32.mrb[0].mxu0
    %v1103 = vadd.f32 %v579, %v1102
    %1104 = vmatprep.mubr.bf16.mxu0 %v470
    %1105 = vmatmul.mubr.bf16.gmra.mrb[0].mxu0 %v469
    %v1106 = vpop.f32.mrb[0].mxu0
    %v1107 = vadd.f32 %v575, %v1106
    %v1108 = vpop.f32.mrb[0].mxu0
    %v1109 = vadd.f32 %v579, %v1108
    %v1110 = vpop.f32.mrb[0].mxu0
    %v1111 = vadd.f32 %v575, %v1110
    %v1112 = vpop.f32.mrb[0].mxu0
    %v1113 = vadd.f32 %v579, %v1112
    %1114 = vdwg.mxu0
    %1115 = vmatprep.subr.bf16.mxu0 %v903
    %1116 = vmatpush1.bf16.msra.mxu0 %v902
    %1117 = vmatprep.subr.bf16.mxu0 %v905
    %1118 = vmatpush1.bf16.msra.mxu0 %v904
    %1119 = vmatprep.subr.bf16.mxu0 %v907
    %1120 = vmatpush1.bf16.msra.mxu0 %v906
    %1121 = vmatprep.subr.bf16.mxu0 %v909
    %1122 = vmatpush1.bf16.msra.mxu0 %v908
    %1123 = vmatprep.subr.bf16.mxu0 %v911
    %1124 = vmatpush1.bf16.msra.mxu0 %v910
    %1125 = vmatprep.subr.bf16.mxu0 %v913
    %1126 = vmatpush1.bf16.msra.mxu0 %v912
    %1127 = vmatprep.subr.bf16.mxu0 %v915
    %1128 = vmatpush1.bf16.msra.mxu0 %v914
    %1129 = vmatprep.subr.bf16.mxu0 %v917
    %1130 = vmatpush1.bf16.msra.mxu0 %v916
    %1131 = vmatprep.subr.bf16.mxu0 %v919
    %1132 = vmatpush1.bf16.msra.mxu0 %v918
    %1133 = vmatprep.subr.bf16.mxu0 %v921
    %1134 = vmatpush1.bf16.msra.mxu0 %v920
    %1135 = vmatprep.subr.bf16.mxu0 %v923
    %1136 = vmatpush1.bf16.msra.mxu0 %v922
    %1137 = vmatprep.subr.bf16.mxu0 %v925
    %1138 = vmatpush1.bf16.msra.mxu0 %v924
    %1139 = vmatprep.subr.bf16.mxu0 %v927
    %1140 = vmatpush1.bf16.msra.mxu0 %v926
    %1141 = vmatprep.subr.bf16.mxu0 %v929
    %1142 = vmatpush1.bf16.msra.mxu0 %v928
    %1143 = vmatprep.subr.bf16.mxu0 %v931
    %1144 = vmatpush1.bf16.msra.mxu0 %v930
    %1145 = vmatprep.subr.bf16.mxu0 %v933
    %1146 = vmatpush1.bf16.msra.mxu0 %v932
    %1147 = vmatprep.mubr.bf16.mxu0 %v466
    %1148 = vmatmul.mubr.bf16.gmra.mrb[0].mxu0 %v465
    %v1149 = vpop.f32.mrb[0].mxu0
    %v1150 = vadd.f32 %v1097, %v1149
    %v1151 = vpop.f32.mrb[0].mxu0
    %v1152 = vadd.f32 %v1099, %v1151
    %v1153 = vpop.f32.mrb[0].mxu0
    %v1154 = vadd.f32 %v1101, %v1153
    %v1155 = vpop.f32.mrb[0].mxu0
    %v1156 = vadd.f32 %v1103, %v1155
    %1157 = vmatprep.mubr.bf16.mxu0 %v472
    %1158 = vmatmul.mubr.bf16.gmra.mrb[0].mxu0 %v471
    %v1159 = vpop.f32.mrb[0].mxu0
    %v1160 = vadd.f32 %v1107, %v1159
    %v1161 = vpop.f32.mrb[0].mxu0
    %v1162 = vadd.f32 %v1109, %v1161
    %v1163 = vpop.f32.mrb[0].mxu0
    %v1164 = vadd.f32 %v1111, %v1163
    %v1165 = vpop.f32.mrb[0].mxu0
    %v1166 = vadd.f32 %v1113, %v1165
    %1167 = vdwg.mxu0
    %1168 = vmatprep.subr.bf16.mxu0 %v935
    %1169 = vmatpush1.bf16.msra.mxu0 %v934
    %1170 = vmatprep.subr.bf16.mxu0 %v937
    %1171 = vmatpush1.bf16.msra.mxu0 %v936
    %1172 = vmatprep.subr.bf16.mxu0 %v939
    %1173 = vmatpush1.bf16.msra.mxu0 %v938
    %1174 = vmatprep.subr.bf16.mxu0 %v941
    %1175 = vmatpush1.bf16.msra.mxu0 %v940
    %1176 = vmatprep.subr.bf16.mxu0 %v943
    %1177 = vmatpush1.bf16.msra.mxu0 %v942
    %1178 = vmatprep.subr.bf16.mxu0 %v945
    %1179 = vmatpush1.bf16.msra.mxu0 %v944
    %1180 = vmatprep.subr.bf16.mxu0 %v947
    %1181 = vmatpush1.bf16.msra.mxu0 %v946
    %1182 = vmatprep.subr.bf16.mxu0 %v949
    %1183 = vmatpush1.bf16.msra.mxu0 %v948
    %1184 = vmatprep.subr.bf16.mxu0 %v951
    %1185 = vmatpush1.bf16.msra.mxu0 %v950
    %1186 = vmatprep.subr.bf16.mxu0 %v953
    %1187 = vmatpush1.bf16.msra.mxu0 %v952
    %1188 = vmatprep.subr.bf16.mxu0 %v955
    %1189 = vmatpush1.bf16.msra.mxu0 %v954
    %1190 = vmatprep.subr.bf16.mxu0 %v957
    %1191 = vmatpush1.bf16.msra.mxu0 %v956
    %1192 = vmatprep.subr.bf16.mxu0 %v959
    %1193 = vmatpush1.bf16.msra.mxu0 %v958
    %1194 = vmatprep.subr.bf16.mxu0 %v961
    %1195 = vmatpush1.bf16.msra.mxu0 %v960
    %1196 = vmatprep.subr.bf16.mxu0 %v963
    %1197 = vmatpush1.bf16.msra.mxu0 %v962
    %1198 = vmatprep.subr.bf16.mxu0 %v965
    %1199 = vmatpush1.bf16.msra.mxu0 %v964
    %1200 = vmatprep.mubr.bf16.mxu0 %v468
    %1201 = vmatmul.mubr.bf16.gmra.mrb[0].mxu0 %v467
    %v1202 = vpop.f32.mrb[0].mxu0
    %v1203 = vadd.f32 %v1150, %v1202
    %v1204 = vpop.f32.mrb[0].mxu0
    %v1205 = vadd.f32 %v1152, %v1204
    %v1206 = vpop.f32.mrb[0].mxu0
    %v1207 = vadd.f32 %v1154, %v1206
    %v1208 = vpop.f32.mrb[0].mxu0
    %v1209 = vadd.f32 %v1156, %v1208
    %1210 = vmatprep.mubr.bf16.mxu0 %v474
    %1211 = vmatmul.mubr.bf16.gmra.mrb[0].mxu0 %v473
    %v1212 = vpop.f32.mrb[0].mxu0
    %v1213 = vadd.f32 %v1160, %v1212
    %v1214 = vpop.f32.mrb[0].mxu0
    %v1215 = vadd.f32 %v1162, %v1214
    %v1216 = vpop.f32.mrb[0].mxu0
    %v1217 = vadd.f32 %v1164, %v1216
    %v1218 = vpop.f32.mrb[0].mxu0
    %v1219 = vadd.f32 %v1166, %v1218
    %1220 = vdwg.mxu0
    %v1221 = vld [vmem:[%s5] sm:$0x3]
    %v1222 = vld [vmem:[%s6] sm:$0x3]
    %v1223 = vld [vmem:[%s8] sm:$0x3]
    %v1224 = vadd.f32 %v1203, %v1207
    %v1225 = vadd.f32 %v1224, %v1213
    %v1226 = vadd.f32 %v1225, %v1217
    %v1227 = vrot.slane %v1226, 4
    %v1228 = vadd.f32 %v1226, %v1227
    %v1229 = vrot.slane %v1228, 2
    %v1230 = vadd.f32 %v1228, %v1229
    %v1231 = vrot.slane %v1230, 1
    %v1232 = vadd.f32 %v1230, %v1231
    %v1233 = vadd.f32 %v1205, %v1209
    %v1234 = vadd.f32 %v1233, %v1215
    %v1235 = vadd.f32 %v1234, %v1219
    %v1236 = vrot.slane %v1235, 4
    %v1237 = vadd.f32 %v1235, %v1236
    %v1238 = vrot.slane %v1237, 2
    %v1239 = vadd.f32 %v1237, %v1238
    %v1240 = vrot.slane %v1239, 1
    %v1241 = vadd.f32 %v1239, %v1240
    %v1242 = vmul.f32 %v1203, %v1203
    %v1243 = vmul.f32 %v1205, %v1205
    %v1244 = vmul.f32 %v1207, %v1207
    %v1245 = vmul.f32 %v1209, %v1209
    %v1246 = vmul.f32 %v1213, %v1213
    %v1247 = vmul.f32 %v1215, %v1215
    %v1248 = vmul.f32 %v1217, %v1217
    %v1249 = vmul.f32 %v1219, %v1219
    %v1250 = vadd.f32 %v1242, %v1244
    %v1251 = vadd.f32 %v1250, %v1246
    %v1252 = vadd.f32 %v1251, %v1248
    %v1253 = vrot.slane %v1252, 4
    %v1254 = vadd.f32 %v1252, %v1253
    %v1255 = vrot.slane %v1254, 2
    %v1256 = vadd.f32 %v1254, %v1255
    %v1257 = vrot.slane %v1256, 1
    %v1258 = vadd.f32 %v1256, %v1257
    %v1259 = vadd.f32 %v1243, %v1245
    %v1260 = vadd.f32 %v1259, %v1247
    %v1261 = vadd.f32 %v1260, %v1249
    %v1262 = vrot.slane %v1261, 4
    %v1263 = vadd.f32 %v1261, %v1262
    %v1264 = vrot.slane %v1263, 2
    %v1265 = vadd.f32 %v1263, %v1264
    %v1266 = vrot.slane %v1265, 1
    %v1267 = vadd.f32 %v1265, %v1266
    %1268 = vrot.lane.b32.xlu0 %v1232, 16
    %v1269 = vpop.permute.xlu0 %1268
    %1270 = vrot.lane.b32.xlu0 %v1241, 16
    %v1271 = vpop.permute.xlu0 %1270
    %v1272 = vsel %vm208, %v1269, %v1271
    %v1273 = vsel %vm208, %v1271, %v1269
    %v1274 = vadd.f32 %v1232, %v1273
    %v1275 = vadd.f32 %v1241, %v1272
    %1276 = vrot.lane.b32.xlu0 %v1258, 16
    %v1277 = vpop.permute.xlu0 %1276
    %1278 = vrot.lane.b32.xlu0 %v1267, 16
    %v1279 = vpop.permute.xlu0 %1278
    %v1280 = vsel %vm208, %v1277, %v1279
    %v1281 = vsel %vm208, %v1279, %v1277
    %v1282 = vadd.f32 %v1258, %v1281
    %v1283 = vadd.f32 %v1267, %v1280
    %1284 = vrot.lane.b32.xlu0 %v1274, 32
    %v1285 = vpop.permute.xlu0 %1284
    %1286 = vrot.lane.b32.xlu0 %v1275, 32
    %v1287 = vpop.permute.xlu0 %1286
    %v1288 = vsel %vm225, %v1285, %v1287
    %v1289 = vsel %vm225, %v1287, %v1285
    %v1290 = vadd.f32 %v1274, %v1289
    %v1291 = vadd.f32 %v1275, %v1288
    %1292 = vrot.lane.b32.xlu0 %v1282, 32
    %v1293 = vpop.permute.xlu0 %1292
    %1294 = vrot.lane.b32.xlu0 %v1283, 32
    %v1295 = vpop.permute.xlu0 %1294
    %v1296 = vsel %vm225, %v1293, %v1295
    %v1297 = vsel %vm225, %v1295, %v1293
    %v1298 = vadd.f32 %v1282, %v1297
    %v1299 = vadd.f32 %v1283, %v1296
    %1300 = vrot.lane.b32.xlu0 %v1290, 64
    %v1301 = vpop.permute.xlu0 %1300
    %1302 = vrot.lane.b32.xlu0 %v1291, 64
    %v1303 = vpop.permute.xlu0 %1302
    %v1304 = vsel %vm242, %v1301, %v1303
    %v1305 = vsel %vm242, %v1303, %v1301
    %v1306 = vadd.f32 %v1290, %v1305
    %v1307 = vadd.f32 %v1291, %v1304
    %1308 = vrot.lane.b32.xlu0 %v1298, 64
    %v1309 = vpop.permute.xlu0 %1308
    %1310 = vrot.lane.b32.xlu0 %v1299, 64
    %v1311 = vpop.permute.xlu0 %1310
    %v1312 = vsel %vm242, %v1309, %v1311
    %v1313 = vsel %vm242, %v1311, %v1309
    %v1314 = vadd.f32 %v1298, %v1313
    %v1315 = vadd.f32 %v1299, %v1312
    %v1316 = vadd.f32 %v1306, %v1307
    %v1317 = vadd.f32 %v1314, %v1315
    %v1318 = vmul.f32 %v1316, %v257
    %v1319 = vmul.f32 %v1317, %v257
    %v1320 = vmul.f32 %v1318, %v1318
    %v1321 = vsub.f32 %v1319, %v1320
    %v1322 = vadd.f32 %v1321, 1e-05
    %v1323 = vrsqrt.pop %v1322
    %v1325 = vcombine.low %v1323, %v1323
    %v1327 = vunpack.c.l.s4 1966171168
    %v1328 = vunpack.c.0.s8 %v1327
    %v1329 = vlaneseq
    %v1330 = vshrl.u32 %v1329, 7
    %v1331 = vsub.s32 %v1328, %v1330
    %v1332 = vrot.slane %v1325, %v1331
    %v1334 = vunpack.c.l.s4 1966171168
    %v1335 = vunpack.c.0.s8 %v1334
    %v1336 = vlaneseq
    %v1337 = vshrl.u32 %v1336, 7
    %v1338 = vsub.s32 %v1335, %v1337
    %v1339 = vrot.slane %v1332, %v1338
    %v1341 = vmul.f32 %v1221, %v1339
    %v1343 = vlaneseq
    %v1344 = vshrl.u32 %v1343, 7
    %v1345 = vsub.s32 0, %v1344
    %v1346 = vrot.slane %v1341, %v1345
    %v1347 = vlaneseq
    %v1348 = vshrl.u32 %v1347, 7
    %v1349 = vsub.s32 1, %v1348
    %v1350 = vrot.slane %v1341, %v1349
    %v1353 = vmul.f32 %v1318, %v1346
    %v1354 = vmul.f32 %v1318, %v1350
    %v1357 = vcombine.low %v1353, %v1354
    %v1359 = vunpack.c.l.s4 1966171168
    %v1360 = vunpack.c.0.s8 %v1359
    %v1361 = vlaneseq
    %v1362 = vshrl.u32 %v1361, 7
    %v1363 = vsub.s32 %v1360, %v1362
    %v1364 = vrot.slane %v1357, %v1363
    %v1366 = vunpack.c.l.s4 1966171168
    %v1367 = vunpack.c.0.s8 %v1366
    %v1368 = vlaneseq
    %v1369 = vshrl.u32 %v1368, 7
    %v1370 = vsub.s32 %v1367, %v1369
    %v1371 = vrot.slane %v1364, %v1370
    %v1373 = vsub.f32 %v1222, %v1371
    %v1374 = vmul.f32 %v1203, %v1346
    %v1375 = vmul.f32 %v1205, %v1350
    %v1376 = vmul.f32 %v1207, %v1346
    %v1377 = vmul.f32 %v1209, %v1350
    %v1378 = vmul.f32 %v1213, %v1346
    %v1379 = vmul.f32 %v1215, %v1350
    %v1380 = vmul.f32 %v1217, %v1346
    %v1381 = vmul.f32 %v1219, %v1350
    %v1383 = vlaneseq
    %v1384 = vshrl.u32 %v1383, 7
    %v1385 = vsub.s32 0, %v1384
    %v1386 = vrot.slane %v1373, %v1385
    %v1387 = vlaneseq
    %v1388 = vshrl.u32 %v1387, 7
    %v1389 = vsub.s32 1, %v1388
    %v1390 = vrot.slane %v1373, %v1389
    %v1393 = vadd.f32 %v1374, %v1386
    %v1394 = vadd.f32 %v1375, %v1390
    %v1395 = vadd.f32 %v1376, %v1386
    %v1396 = vadd.f32 %v1377, %v1390
    %v1397 = vadd.f32 %v1378, %v1386
    %v1398 = vadd.f32 %v1379, %v1390
    %v1399 = vadd.f32 %v1380, %v1386
    %v1400 = vadd.f32 %v1381, %v1390
    %v1401 = vxor.u32 %v1393, 2147483648
    %v1402 = vxor.u32 %v1394, 2147483648
    %v1403 = vxor.u32 %v1395, 2147483648
    %v1404 = vxor.u32 %v1396, 2147483648
    %v1405 = vxor.u32 %v1397, 2147483648
    %v1406 = vxor.u32 %v1398, 2147483648
    %v1407 = vxor.u32 %v1399, 2147483648
    %v1408 = vxor.u32 %v1400, 2147483648
    %v1409 = vmul.f32 %v1401, 1.442695
    %v1410 = vpow.pop %v1409
    %v1411 = vmul.f32 %v1402, 1.442695
    %v1412 = vpow.pop %v1411
    %v1413 = vmul.f32 %v1403, 1.442695
    %v1414 = vpow.pop %v1413
    %v1415 = vmul.f32 %v1404, 1.442695
    %v1416 = vpow.pop %v1415
    %v1417 = vmul.f32 %v1405, 1.442695
    %v1418 = vpow.pop %v1417
    %v1419 = vmul.f32 %v1406, 1.442695
    %v1420 = vpow.pop %v1419
    %v1421 = vmul.f32 %v1407, 1.442695
    %v1422 = vpow.pop %v1421
    %v1423 = vmul.f32 %v1408, 1.442695
    %v1424 = vpow.pop %v1423
    %v1425 = vadd.f32 %v1410, 1.0
    %v1426 = vadd.f32 %v1412, 1.0
    %v1427 = vadd.f32 %v1414, 1.0
    %v1428 = vadd.f32 %v1416, 1.0
    %v1429 = vadd.f32 %v1418, 1.0
    %v1430 = vadd.f32 %v1420, 1.0
    %v1431 = vadd.f32 %v1422, 1.0
    %v1432 = vadd.f32 %v1424, 1.0
    %v1433 = vrcp.pop %v1425
    %v1434 = vmul.f32 1.0, %v1433
    %v1435 = vrcp.pop %v1426
    %v1436 = vmul.f32 1.0, %v1435
    %v1437 = vrcp.pop %v1427
    %v1438 = vmul.f32 1.0, %v1437
    %v1439 = vrcp.pop %v1428
    %v1440 = vmul.f32 1.0, %v1439
    %v1441 = vrcp.pop %v1429
    %v1442 = vmul.f32 1.0, %v1441
    %v1443 = vrcp.pop %v1430
    %v1444 = vmul.f32 1.0, %v1443
    %v1445 = vrcp.pop %v1431
    %v1446 = vmul.f32 1.0, %v1445
    %v1447 = vrcp.pop %v1432
    %v1448 = vmul.f32 1.0, %v1447
    %v1449 = vmul.f32 %v1393, %v1434
    %v1450 = vmul.f32 %v1394, %v1436
    %v1451 = vmul.f32 %v1395, %v1438
    %v1452 = vmul.f32 %v1396, %v1440
    %v1453 = vmul.f32 %v1397, %v1442
    %v1454 = vmul.f32 %v1398, %v1444
    %v1455 = vmul.f32 %v1399, %v1446
    %v1456 = vmul.f32 %v1400, %v1448
    %v1457 = vrot.slane %v1449, 7
    %v1458 = vrot.slane %v1450, 7
    %v1459 = vrot.slane %v1451, 7
    %v1460 = vrot.slane %v1452, 7
    %v1461 = vrot.slane %v1453, 7
    %v1462 = vrot.slane %v1454, 7
    %v1463 = vrot.slane %v1455, 7
    %v1464 = vrot.slane %v1456, 7
    %v1465 = vsel %vm405, %v1461, %v1463
    %v1466 = vsel %vm405, %v1462, %v1464
    %v1467 = vsel %vm405, %v1459, %v1461
    %v1468 = vsel %vm405, %v1460, %v1462
    %v1469 = vsel %vm405, %v1457, %v1459
    %v1470 = vsel %vm405, %v1458, %v1460
    %v1471 = vsel %vm405, %v1463, %v1457
    %v1472 = vsel %vm405, %v1464, %v1458
    %v1473 = vsel %vm418, %v1471, 0.0
    %v1474 = vsel %vm418, %v1472, 0.0
    %v1475 = vsel %vm419, %v1469, 0.0
    %v1476 = vsel %vm419, %v1470, 0.0
    %v1477 = vsel %vm420, %v1467, 0.0
    %v1478 = vsel %vm420, %v1468, 0.0
    %v1479 = vsel %vm421, %v1465, 0.0
    %v1480 = vsel %vm421, %v1466, 0.0
    %v1481 = vrot.slane %v1449, 1
    %v1482 = vrot.slane %v1450, 1
    %v1483 = vrot.slane %v1451, 1
    %v1484 = vrot.slane %v1452, 1
    %v1485 = vrot.slane %v1453, 1
    %v1486 = vrot.slane %v1454, 1
    %v1487 = vrot.slane %v1455, 1
    %v1488 = vrot.slane %v1456, 1
    %v1489 = vsel %vm438, %v1485, %v1487
    %v1490 = vsel %vm438, %v1486, %v1488
    %v1491 = vsel %vm438, %v1483, %v1485
    %v1492 = vsel %vm438, %v1484, %v1486
    %v1493 = vsel %vm438, %v1481, %v1483
    %v1494 = vsel %vm438, %v1482, %v1484
    %v1495 = vsel %vm438, %v1487, %v1481
    %v1496 = vsel %vm438, %v1488, %v1482
    %v1497 = vsel %vm451, %v1493, 0.0
    %v1498 = vsel %vm451, %v1494, 0.0
    %v1499 = vsel %vm452, %v1491, 0.0
    %v1500 = vsel %vm452, %v1492, 0.0
    %v1501 = vsel %vm453, %v1489, 0.0
    %v1502 = vsel %vm453, %v1490, 0.0
    %v1503 = vsel %vm454, %v1495, 0.0
    %v1504 = vsel %vm454, %v1496, 0.0
    %v1505 = vpack.c.bf16 %v1475, %v1473
    %v1506 = vpack.c.bf16 %v1476, %v1474
    %v1507 = vpack.c.bf16 %v1451, %v1449
    %v1508 = vpack.c.bf16 %v1452, %v1450
    %v1509 = vpack.c.bf16 %v1499, %v1497
    %v1510 = vpack.c.bf16 %v1500, %v1498
    %v1511 = vpack.c.bf16 %v1479, %v1477
    %v1512 = vpack.c.bf16 %v1480, %v1478
    %v1513 = vpack.c.bf16 %v1455, %v1453
    %v1514 = vpack.c.bf16 %v1456, %v1454
    %v1515 = vpack.c.bf16 %v1503, %v1501
    %v1516 = vpack.c.bf16 %v1504, %v1502
    %v1517 = vld [vmem:[#allocation7] sm:$0xff]
    %v1518 = vld [vmem:[#allocation7 + $0x8] sm:$0xff]
    %v1519 = vld [vmem:[#allocation7 + $0x10] sm:$0xff]
    %v1520 = vld [vmem:[#allocation7 + $0x18] sm:$0xff]
    %v1521 = vld [vmem:[#allocation7 + $0x20] sm:$0xff]
    %v1522 = vld [vmem:[#allocation7 + $0x28] sm:$0xff]
    %v1523 = vld [vmem:[#allocation7 + $0x30] sm:$0xff]
    %v1524 = vld [vmem:[#allocation7 + $0x38] sm:$0xff]
    %v1525 = vld [vmem:[#allocation7 + $0x40] sm:$0xff]
    %v1526 = vld [vmem:[#allocation7 + $0x48] sm:$0xff]
    %v1527 = vld [vmem:[#allocation7 + $0x50] sm:$0xff]
    %v1528 = vld [vmem:[#allocation7 + $0x58] sm:$0xff]
    %v1529 = vld [vmem:[#allocation7 + $0x60] sm:$0xff]
    %v1530 = vld [vmem:[#allocation7 + $0x68] sm:$0xff]
    %v1531 = vld [vmem:[#allocation7 + $0x70] sm:$0xff]
    %v1532 = vld [vmem:[#allocation7 + $0x78] sm:$0xff]
    %v1533 = vld [vmem:[#allocation7 + $0x80] sm:$0xff]
    %v1534 = vld [vmem:[#allocation7 + $0x88] sm:$0xff]
    %v1535 = vld [vmem:[#allocation7 + $0x90] sm:$0xff]
    %v1536 = vld [vmem:[#allocation7 + $0x98] sm:$0xff]
    %v1537 = vld [vmem:[#allocation7 + $0xa0] sm:$0xff]
    %v1538 = vld [vmem:[#allocation7 + $0xa8] sm:$0xff]
    %v1539 = vld [vmem:[#allocation7 + $0xb0] sm:$0xff]
    %v1540 = vld [vmem:[#allocation7 + $0xb8] sm:$0xff]
    %v1541 = vld [vmem:[#allocation7 + $0xc0] sm:$0xff]
    %v1542 = vld [vmem:[#allocation7 + $0xc8] sm:$0xff]
    %v1543 = vld [vmem:[#allocation7 + $0xd0] sm:$0xff]
    %v1544 = vld [vmem:[#allocation7 + $0xd8] sm:$0xff]
    %v1545 = vld [vmem:[#allocation7 + $0xe0] sm:$0xff]
    %v1546 = vld [vmem:[#allocation7 + $0xe8] sm:$0xff]
    %v1547 = vld [vmem:[#allocation7 + $0xf0] sm:$0xff]
    %v1548 = vld [vmem:[#allocation7 + $0xf8] sm:$0xff]
    %v1549 = vld [vmem:[#allocation7 + $0x100] sm:$0xff]
    %v1550 = vld [vmem:[#allocation7 + $0x108] sm:$0xff]
    %v1551 = vld [vmem:[#allocation7 + $0x110] sm:$0xff]
    %v1552 = vld [vmem:[#allocation7 + $0x118] sm:$0xff]
    %v1553 = vld [vmem:[#allocation7 + $0x120] sm:$0xff]
    %v1554 = vld [vmem:[#allocation7 + $0x128] sm:$0xff]
    %v1555 = vld [vmem:[#allocation7 + $0x130] sm:$0xff]
    %v1556 = vld [vmem:[#allocation7 + $0x138] sm:$0xff]
    %v1557 = vld [vmem:[#allocation7 + $0x140] sm:$0xff]
    %v1558 = vld [vmem:[#allocation7 + $0x148] sm:$0xff]
    %v1559 = vld [vmem:[#allocation7 + $0x150] sm:$0xff]
    %v1560 = vld [vmem:[#allocation7 + $0x158] sm:$0xff]
    %v1561 = vld [vmem:[#allocation7 + $0x160] sm:$0xff]
    %v1562 = vld [vmem:[#allocation7 + $0x168] sm:$0xff]
    %v1563 = vld [vmem:[#allocation7 + $0x170] sm:$0xff]
    %v1564 = vld [vmem:[#allocation7 + $0x178] sm:$0xff]
    %v1565 = vld [vmem:[#allocation7 + $0x180] sm:$0xff]
    %v1566 = vld [vmem:[#allocation7 + $0x188] sm:$0xff]
    %v1567 = vld [vmem:[#allocation7 + $0x190] sm:$0xff]
    %v1568 = vld [vmem:[#allocation7 + $0x198] sm:$0xff]
    %v1569 = vld [vmem:[#allocation7 + $0x1a0] sm:$0xff]
    %v1570 = vld [vmem:[#allocation7 + $0x1a8] sm:$0xff]
    %v1571 = vld [vmem:[#allocation7 + $0x1b0] sm:$0xff]
    %v1572 = vld [vmem:[#allocation7 + $0x1b8] sm:$0xff]
    %v1573 = vld [vmem:[#allocation7 + $0x1c0] sm:$0xff]
    %v1574 = vld [vmem:[#allocation7 + $0x1c8] sm:$0xff]
    %v1575 = vld [vmem:[#allocation7 + $0x1d0] sm:$0xff]
    %v1576 = vld [vmem:[#allocation7 + $0x1d8] sm:$0xff]
    %v1577 = vld [vmem:[#allocation7 + $0x1e0] sm:$0xff]
    %v1578 = vld [vmem:[#allocation7 + $0x1e8] sm:$0xff]
    %v1579 = vld [vmem:[#allocation7 + $0x1f0] sm:$0xff]
    %v1580 = vld [vmem:[#allocation7 + $0x1f8] sm:$0xff]
    %v1581 = vld [vmem:[#allocation7 + $0x200] sm:$0xff]
    %v1582 = vld [vmem:[#allocation7 + $0x208] sm:$0xff]
    %v1583 = vld [vmem:[#allocation7 + $0x210] sm:$0xff]
    %v1584 = vld [vmem:[#allocation7 + $0x218] sm:$0xff]
    %v1585 = vld [vmem:[#allocation7 + $0x220] sm:$0xff]
    %v1586 = vld [vmem:[#allocation7 + $0x228] sm:$0xff]
    %v1587 = vld [vmem:[#allocation7 + $0x230] sm:$0xff]
    %v1588 = vld [vmem:[#allocation7 + $0x238] sm:$0xff]
    %v1589 = vld [vmem:[#allocation7 + $0x240] sm:$0xff]
    %v1590 = vld [vmem:[#allocation7 + $0x248] sm:$0xff]
    %v1591 = vld [vmem:[#allocation7 + $0x250] sm:$0xff]
    %v1592 = vld [vmem:[#allocation7 + $0x258] sm:$0xff]
    %v1593 = vld [vmem:[#allocation7 + $0x260] sm:$0xff]
    %v1594 = vld [vmem:[#allocation7 + $0x268] sm:$0xff]
    %v1595 = vld [vmem:[#allocation7 + $0x270] sm:$0xff]
    %v1596 = vld [vmem:[#allocation7 + $0x278] sm:$0xff]
    %v1597 = vld [vmem:[#allocation7 + $0x280] sm:$0xff]
    %v1598 = vld [vmem:[#allocation7 + $0x288] sm:$0xff]
    %v1599 = vld [vmem:[#allocation7 + $0x290] sm:$0xff]
    %v1600 = vld [vmem:[#allocation7 + $0x298] sm:$0xff]
    %v1601 = vld [vmem:[#allocation7 + $0x2a0] sm:$0xff]
    %v1602 = vld [vmem:[#allocation7 + $0x2a8] sm:$0xff]
    %v1603 = vld [vmem:[#allocation7 + $0x2b0] sm:$0xff]
    %v1604 = vld [vmem:[#allocation7 + $0x2b8] sm:$0xff]
    %v1605 = vld [vmem:[#allocation7 + $0x2c0] sm:$0xff]
    %v1606 = vld [vmem:[#allocation7 + $0x2c8] sm:$0xff]
    %v1607 = vld [vmem:[#allocation7 + $0x2d0] sm:$0xff]
    %v1608 = vld [vmem:[#allocation7 + $0x2d8] sm:$0xff]
    %v1609 = vld [vmem:[#allocation7 + $0x2e0] sm:$0xff]
    %v1610 = vld [vmem:[#allocation7 + $0x2e8] sm:$0xff]
    %v1611 = vld [vmem:[#allocation7 + $0x2f0] sm:$0xff]
    %v1612 = vld [vmem:[#allocation7 + $0x2f8] sm:$0xff]
    %v1614 = vlaneseq
    %v1615 = vshrl.u32 %v1614, 7
    %v1616 = vsub.s32 0, %v1615
    %v1617 = vrot.slane %v1223, %v1616
    %v1618 = vlaneseq
    %v1619 = vshrl.u32 %v1618, 7
    %v1620 = vsub.s32 1, %v1619
    %v1621 = vrot.slane %v1223, %v1620
    %v1720 = vunpack.c.l.b16 %v1517
    %v1721 = vunpack.c.h.b16 %v1517
    %v1722 = vunpack.c.l.b16 %v1518
    %v1723 = vunpack.c.h.b16 %v1518
    %v1724 = vunpack.c.l.b16 %v1519
    %v1725 = vunpack.c.h.b16 %v1519
    %v1726 = vunpack.c.l.b16 %v1520
    %v1727 = vunpack.c.h.b16 %v1520
    %v1728 = vunpack.c.l.b16 %v1521
    %v1729 = vunpack.c.h.b16 %v1521
    %v1730 = vunpack.c.l.b16 %v1522
    %v1731 = vunpack.c.h.b16 %v1522
    %v1732 = vunpack.c.l.b16 %v1523
    %v1733 = vunpack.c.h.b16 %v1523
    %v1734 = vunpack.c.l.b16 %v1524
    %v1735 = vunpack.c.h.b16 %v1524
    %v1736 = vunpack.c.l.b16 %v1525
    %v1737 = vunpack.c.h.b16 %v1525
    %v1738 = vunpack.c.l.b16 %v1526
    %v1739 = vunpack.c.h.b16 %v1526
    %v1740 = vunpack.c.l.b16 %v1527
    %v1741 = vunpack.c.h.b16 %v1527
    %v1742 = vunpack.c.l.b16 %v1528
    %v1743 = vunpack.c.h.b16 %v1528
    %v1744 = vunpack.c.l.b16 %v1529
    %v1745 = vunpack.c.h.b16 %v1529
    %v1746 = vunpack.c.l.b16 %v1530
    %v1747 = vunpack.c.h.b16 %v1530
    %v1748 = vunpack.c.l.b16 %v1531
    %v1749 = vunpack.c.h.b16 %v1531
    %v1750 = vunpack.c.l.b16 %v1532
    %v1751 = vunpack.c.h.b16 %v1532
    %v1752 = vunpack.c.l.b16 %v1533
    %v1753 = vunpack.c.h.b16 %v1533
    %v1754 = vunpack.c.l.b16 %v1534
    %v1755 = vunpack.c.h.b16 %v1534
    %v1756 = vunpack.c.l.b16 %v1535
    %v1757 = vunpack.c.h.b16 %v1535
    %v1758 = vunpack.c.l.b16 %v1536
    %v1759 = vunpack.c.h.b16 %v1536
    %v1760 = vunpack.c.l.b16 %v1537
    %v1761 = vunpack.c.h.b16 %v1537
    %v1762 = vunpack.c.l.b16 %v1538
    %v1763 = vunpack.c.h.b16 %v1538
    %v1764 = vunpack.c.l.b16 %v1539
    %v1765 = vunpack.c.h.b16 %v1539
    %v1766 = vunpack.c.l.b16 %v1540
    %v1767 = vunpack.c.h.b16 %v1540
    %v1768 = vunpack.c.l.b16 %v1541
    %v1769 = vunpack.c.h.b16 %v1541
    %v1770 = vunpack.c.l.b16 %v1542
    %v1771 = vunpack.c.h.b16 %v1542
    %v1772 = vunpack.c.l.b16 %v1543
    %v1773 = vunpack.c.h.b16 %v1543
    %v1774 = vunpack.c.l.b16 %v1544
    %v1775 = vunpack.c.h.b16 %v1544
    %v1776 = vunpack.c.l.b16 %v1545
    %v1777 = vunpack.c.h.b16 %v1545
    %v1778 = vunpack.c.l.b16 %v1546
    %v1779 = vunpack.c.h.b16 %v1546
    %v1780 = vunpack.c.l.b16 %v1547
    %v1781 = vunpack.c.h.b16 %v1547
    %v1782 = vunpack.c.l.b16 %v1548
    %v1783 = vunpack.c.h.b16 %v1548
    %v1784 = vunpack.c.l.b16 %v1549
    %v1785 = vunpack.c.h.b16 %v1549
    %v1786 = vunpack.c.l.b16 %v1550
    %v1787 = vunpack.c.h.b16 %v1550
    %v1788 = vunpack.c.l.b16 %v1551
    %v1789 = vunpack.c.h.b16 %v1551
    %v1790 = vunpack.c.l.b16 %v1552
    %v1791 = vunpack.c.h.b16 %v1552
    %v1792 = vunpack.c.l.b16 %v1553
    %v1793 = vunpack.c.h.b16 %v1553
    %v1794 = vunpack.c.l.b16 %v1554
    %v1795 = vunpack.c.h.b16 %v1554
    %v1796 = vunpack.c.l.b16 %v1555
    %v1797 = vunpack.c.h.b16 %v1555
    %v1798 = vunpack.c.l.b16 %v1556
    %v1799 = vunpack.c.h.b16 %v1556
    %v1800 = vunpack.c.l.b16 %v1557
    %v1801 = vunpack.c.h.b16 %v1557
    %v1802 = vunpack.c.l.b16 %v1558
    %v1803 = vunpack.c.h.b16 %v1558
    %v1804 = vunpack.c.l.b16 %v1559
    %v1805 = vunpack.c.h.b16 %v1559
    %v1806 = vunpack.c.l.b16 %v1560
    %v1807 = vunpack.c.h.b16 %v1560
    %v1808 = vunpack.c.l.b16 %v1561
    %v1809 = vunpack.c.h.b16 %v1561
    %v1810 = vunpack.c.l.b16 %v1562
    %v1811 = vunpack.c.h.b16 %v1562
    %v1812 = vunpack.c.l.b16 %v1563
    %v1813 = vunpack.c.h.b16 %v1563
    %v1814 = vunpack.c.l.b16 %v1564
    %v1815 = vunpack.c.h.b16 %v1564
    %v1816 = vunpack.c.l.b16 %v1565
    %v1817 = vunpack.c.h.b16 %v1565
    %v1818 = vunpack.c.l.b16 %v1566
    %v1819 = vunpack.c.h.b16 %v1566
    %v1820 = vunpack.c.l.b16 %v1567
    %v1821 = vunpack.c.h.b16 %v1567
    %v1822 = vunpack.c.l.b16 %v1568
    %v1823 = vunpack.c.h.b16 %v1568
    %v1824 = vunpack.c.l.b16 %v1569
    %v1825 = vunpack.c.h.b16 %v1569
    %v1826 = vunpack.c.l.b16 %v1570
    %v1827 = vunpack.c.h.b16 %v1570
    %v1828 = vunpack.c.l.b16 %v1571
    %v1829 = vunpack.c.h.b16 %v1571
    %v1830 = vunpack.c.l.b16 %v1572
    %v1831 = vunpack.c.h.b16 %v1572
    %v1832 = vunpack.c.l.b16 %v1573
    %v1833 = vunpack.c.h.b16 %v1573
    %v1834 = vunpack.c.l.b16 %v1574
    %v1835 = vunpack.c.h.b16 %v1574
    %v1836 = vunpack.c.l.b16 %v1575
    %v1837 = vunpack.c.h.b16 %v1575
    %v1838 = vunpack.c.l.b16 %v1576
    %v1839 = vunpack.c.h.b16 %v1576
    %v1840 = vunpack.c.l.b16 %v1577
    %v1841 = vunpack.c.h.b16 %v1577
    %v1842 = vunpack.c.l.b16 %v1578
    %v1843 = vunpack.c.h.b16 %v1578
    %v1844 = vunpack.c.l.b16 %v1579
    %v1845 = vunpack.c.h.b16 %v1579
    %v1846 = vunpack.c.l.b16 %v1580
    %v1847 = vunpack.c.h.b16 %v1580
    %v1848 = vunpack.c.l.b16 %v1581
    %v1849 = vunpack.c.h.b16 %v1581
    %v1850 = vunpack.c.l.b16 %v1582
    %v1851 = vunpack.c.h.b16 %v1582
    %v1852 = vunpack.c.l.b16 %v1583
    %v1853 = vunpack.c.h.b16 %v1583
    %v1854 = vunpack.c.l.b16 %v1584
    %v1855 = vunpack.c.h.b16 %v1584
    %v1856 = vunpack.c.l.b16 %v1585
    %v1857 = vunpack.c.h.b16 %v1585
    %v1858 = vunpack.c.l.b16 %v1586
    %v1859 = vunpack.c.h.b16 %v1586
    %v1860 = vunpack.c.l.b16 %v1587
    %v1861 = vunpack.c.h.b16 %v1587
    %v1862 = vunpack.c.l.b16 %v1588
    %v1863 = vunpack.c.h.b16 %v1588
    %v1864 = vunpack.c.l.b16 %v1589
    %v1865 = vunpack.c.h.b16 %v1589
    %v1866 = vunpack.c.l.b16 %v1590
    %v1867 = vunpack.c.h.b16 %v1590
    %v1868 = vunpack.c.l.b16 %v1591
    %v1869 = vunpack.c.h.b16 %v1591
    %v1870 = vunpack.c.l.b16 %v1592
    %v1871 = vunpack.c.h.b16 %v1592
    %v1872 = vunpack.c.l.b16 %v1593
    %v1873 = vunpack.c.h.b16 %v1593
    %v1874 = vunpack.c.l.b16 %v1594
    %v1875 = vunpack.c.h.b16 %v1594
    %v1876 = vunpack.c.l.b16 %v1595
    %v1877 = vunpack.c.h.b16 %v1595
    %v1878 = vunpack.c.l.b16 %v1596
    %v1879 = vunpack.c.h.b16 %v1596
    %v1880 = vunpack.c.l.b16 %v1597
    %v1881 = vunpack.c.h.b16 %v1597
    %v1882 = vunpack.c.l.b16 %v1598
    %v1883 = vunpack.c.h.b16 %v1598
    %v1884 = vunpack.c.l.b16 %v1599
    %v1885 = vunpack.c.h.b16 %v1599
    %v1886 = vunpack.c.l.b16 %v1600
    %v1887 = vunpack.c.h.b16 %v1600
    %v1888 = vunpack.c.l.b16 %v1601
    %v1889 = vunpack.c.h.b16 %v1601
    %v1890 = vunpack.c.l.b16 %v1602
    %v1891 = vunpack.c.h.b16 %v1602
    %v1892 = vunpack.c.l.b16 %v1603
    %v1893 = vunpack.c.h.b16 %v1603
    %v1894 = vunpack.c.l.b16 %v1604
    %v1895 = vunpack.c.h.b16 %v1604
    %v1896 = vunpack.c.l.b16 %v1605
    %v1897 = vunpack.c.h.b16 %v1605
    %v1898 = vunpack.c.l.b16 %v1606
    %v1899 = vunpack.c.h.b16 %v1606
    %v1900 = vunpack.c.l.b16 %v1607
    %v1901 = vunpack.c.h.b16 %v1607
    %v1902 = vunpack.c.l.b16 %v1608
    %v1903 = vunpack.c.h.b16 %v1608
    %v1904 = vunpack.c.l.b16 %v1609
    %v1905 = vunpack.c.h.b16 %v1609
    %v1906 = vunpack.c.l.b16 %v1610
    %v1907 = vunpack.c.h.b16 %v1610
    %v1908 = vunpack.c.l.b16 %v1611
    %v1909 = vunpack.c.h.b16 %v1611
    %v1910 = vunpack.c.l.b16 %v1612
    %v1911 = vunpack.c.h.b16 %v1612
    %v1912 = vpack.c.b16 %v1722, %v1720
    %v1913 = vpack.c.b16 %v1723, %v1721
    %v1914 = vpack.c.b16 %v1726, %v1724
    %v1915 = vpack.c.b16 %v1727, %v1725
    %v1916 = vpack.c.b16 %v1730, %v1728
    %v1917 = vpack.c.b16 %v1731, %v1729
    %v1918 = vpack.c.b16 %v1734, %v1732
    %v1919 = vpack.c.b16 %v1735, %v1733
    %v1920 = vpack.c.b16 %v1738, %v1736
    %v1921 = vpack.c.b16 %v1739, %v1737
    %v1922 = vpack.c.b16 %v1742, %v1740
    %v1923 = vpack.c.b16 %v1743, %v1741
    %v1924 = vpack.c.b16 %v1746, %v1744
    %v1925 = vpack.c.b16 %v1747, %v1745
    %v1926 = vpack.c.b16 %v1750, %v1748
    %v1927 = vpack.c.b16 %v1751, %v1749
    %v1928 = vpack.c.b16 %v1754, %v1752
    %v1929 = vpack.c.b16 %v1755, %v1753
    %v1930 = vpack.c.b16 %v1758, %v1756
    %v1931 = vpack.c.b16 %v1759, %v1757
    %v1932 = vpack.c.b16 %v1762, %v1760
    %v1933 = vpack.c.b16 %v1763, %v1761
    %v1934 = vpack.c.b16 %v1766, %v1764
    %v1935 = vpack.c.b16 %v1767, %v1765
    %v1936 = vpack.c.b16 %v1770, %v1768
    %v1937 = vpack.c.b16 %v1771, %v1769
    %v1938 = vpack.c.b16 %v1774, %v1772
    %v1939 = vpack.c.b16 %v1775, %v1773
    %v1940 = vpack.c.b16 %v1778, %v1776
    %v1941 = vpack.c.b16 %v1779, %v1777
    %v1942 = vpack.c.b16 %v1782, %v1780
    %v1943 = vpack.c.b16 %v1783, %v1781
    %v1944 = vpack.c.b16 %v1786, %v1784
    %v1945 = vpack.c.b16 %v1787, %v1785
    %v1946 = vpack.c.b16 %v1790, %v1788
    %v1947 = vpack.c.b16 %v1791, %v1789
    %v1948 = vpack.c.b16 %v1794, %v1792
    %v1949 = vpack.c.b16 %v1795, %v1793
    %v1950 = vpack.c.b16 %v1798, %v1796
    %v1951 = vpack.c.b16 %v1799, %v1797
    %v1952 = vpack.c.b16 %v1802, %v1800
    %v1953 = vpack.c.b16 %v1803, %v1801
    %v1954 = vpack.c.b16 %v1806, %v1804
    %v1955 = vpack.c.b16 %v1807, %v1805
    %v1956 = vpack.c.b16 %v1810, %v1808
    %v1957 = vpack.c.b16 %v1811, %v1809
    %v1958 = vpack.c.b16 %v1814, %v1812
    %v1959 = vpack.c.b16 %v1815, %v1813
    %v1960 = vpack.c.b16 %v1818, %v1816
    %v1961 = vpack.c.b16 %v1819, %v1817
    %v1962 = vpack.c.b16 %v1822, %v1820
    %v1963 = vpack.c.b16 %v1823, %v1821
    %v1964 = vpack.c.b16 %v1826, %v1824
    %v1965 = vpack.c.b16 %v1827, %v1825
    %v1966 = vpack.c.b16 %v1830, %v1828
    %v1967 = vpack.c.b16 %v1831, %v1829
    %v1968 = vpack.c.b16 %v1834, %v1832
    %v1969 = vpack.c.b16 %v1835, %v1833
    %v1970 = vpack.c.b16 %v1838, %v1836
    %v1971 = vpack.c.b16 %v1839, %v1837
    %v1972 = vpack.c.b16 %v1842, %v1840
    %v1973 = vpack.c.b16 %v1843, %v1841
    %v1974 = vpack.c.b16 %v1846, %v1844
    %v1975 = vpack.c.b16 %v1847, %v1845
    %v1976 = vpack.c.b16 %v1850, %v1848
    %v1977 = vpack.c.b16 %v1851, %v1849
    %v1978 = vpack.c.b16 %v1854, %v1852
    %v1979 = vpack.c.b16 %v1855, %v1853
    %v1980 = vpack.c.b16 %v1858, %v1856
    %v1981 = vpack.c.b16 %v1859, %v1857
    %v1982 = vpack.c.b16 %v1862, %v1860
    %v1983 = vpack.c.b16 %v1863, %v1861
    %v1984 = vpack.c.b16 %v1866, %v1864
    %v1985 = vpack.c.b16 %v1867, %v1865
    %v1986 = vpack.c.b16 %v1870, %v1868
    %v1987 = vpack.c.b16 %v1871, %v1869
    %v1988 = vpack.c.b16 %v1874, %v1872
    %v1989 = vpack.c.b16 %v1875, %v1873
    %v1990 = vpack.c.b16 %v1878, %v1876
    %v1991 = vpack.c.b16 %v1879, %v1877
    %v1992 = vpack.c.b16 %v1882, %v1880
    %v1993 = vpack.c.b16 %v1883, %v1881
    %v1994 = vpack.c.b16 %v1886, %v1884
    %v1995 = vpack.c.b16 %v1887, %v1885
    %v1996 = vpack.c.b16 %v1890, %v1888
    %v1997 = vpack.c.b16 %v1891, %v1889
    %v1998 = vpack.c.b16 %v1894, %v1892
    %v1999 = vpack.c.b16 %v1895, %v1893
    %v2000 = vpack.c.b16 %v1898, %v1896
    %v2001 = vpack.c.b16 %v1899, %v1897
    %v2002 = vpack.c.b16 %v1902, %v1900
    %v2003 = vpack.c.b16 %v1903, %v1901
    %v2004 = vpack.c.b16 %v1906, %v1904
    %v2005 = vpack.c.b16 %v1907, %v1905
    %v2006 = vpack.c.b16 %v1910, %v1908
    %v2007 = vpack.c.b16 %v1911, %v1909
    %2104 = vmatprep.subr.bf16.mxu0 %v1913
    %2105 = vmatpush1.bf16.msra.mxu0 %v1912
    %2106 = vmatprep.subr.bf16.mxu0 %v1915
    %2107 = vmatpush1.bf16.msra.mxu0 %v1914
    %2108 = vmatprep.subr.bf16.mxu0 %v1917
    %2109 = vmatpush1.bf16.msra.mxu0 %v1916
    %2110 = vmatprep.subr.bf16.mxu0 %v1919
    %2111 = vmatpush1.bf16.msra.mxu0 %v1918
    %2112 = vmatprep.subr.bf16.mxu0 %v1921
    %2113 = vmatpush1.bf16.msra.mxu0 %v1920
    %2114 = vmatprep.subr.bf16.mxu0 %v1923
    %2115 = vmatpush1.bf16.msra.mxu0 %v1922
    %2116 = vmatprep.subr.bf16.mxu0 %v1925
    %2117 = vmatpush1.bf16.msra.mxu0 %v1924
    %2118 = vmatprep.subr.bf16.mxu0 %v1927
    %2119 = vmatpush1.bf16.msra.mxu0 %v1926
    %2120 = vmatprep.subr.bf16.mxu0 %v1929
    %2121 = vmatpush1.bf16.msra.mxu0 %v1928
    %2122 = vmatprep.subr.bf16.mxu0 %v1931
    %2123 = vmatpush1.bf16.msra.mxu0 %v1930
    %2124 = vmatprep.subr.bf16.mxu0 %v1933
    %2125 = vmatpush1.bf16.msra.mxu0 %v1932
    %2126 = vmatprep.subr.bf16.mxu0 %v1935
    %2127 = vmatpush1.bf16.msra.mxu0 %v1934
    %2128 = vmatprep.subr.bf16.mxu0 %v1937
    %2129 = vmatpush1.bf16.msra.mxu0 %v1936
    %2130 = vmatprep.subr.bf16.mxu0 %v1939
    %2131 = vmatpush1.bf16.msra.mxu0 %v1938
    %2132 = vmatprep.subr.bf16.mxu0 %v1941
    %2133 = vmatpush1.bf16.msra.mxu0 %v1940
    %2134 = vmatprep.subr.bf16.mxu0 %v1943
    %2135 = vmatpush1.bf16.msra.mxu0 %v1942
    %2136 = vmatprep.mubr.bf16.mxu0 %v1506
    %2137 = vmatmul.mubr.bf16.gmra.mrb[0].mxu0 %v1505
    %v2138 = vpop.f32.mrb[0].mxu0
    %v2139 = vadd.f32 %v1617, %v2138
    %v2140 = vpop.f32.mrb[0].mxu0
    %v2141 = vadd.f32 %v1621, %v2140
    %v2142 = vpop.f32.mrb[0].mxu0
    %v2143 = vadd.f32 %v1617, %v2142
    %v2144 = vpop.f32.mrb[0].mxu0
    %v2145 = vadd.f32 %v1621, %v2144
    %2146 = vmatprep.mubr.bf16.mxu0 %v1512
    %2147 = vmatmul.mubr.bf16.gmra.mrb[0].mxu0 %v1511
    %v2148 = vpop.f32.mrb[0].mxu0
    %v2149 = vadd.f32 %v1617, %v2148
    %v2150 = vpop.f32.mrb[0].mxu0
    %v2151 = vadd.f32 %v1621, %v2150
    %v2152 = vpop.f32.mrb[0].mxu0
    %v2153 = vadd.f32 %v1617, %v2152
    %v2154 = vpop.f32.mrb[0].mxu0
    %v2155 = vadd.f32 %v1621, %v2154
    %2156 = vdwg.mxu0
    %2157 = vmatprep.subr.bf16.mxu0 %v1945
    %2158 = vmatpush1.bf16.msra.mxu0 %v1944
    %2159 = vmatprep.subr.bf16.mxu0 %v1947
    %2160 = vmatpush1.bf16.msra.mxu0 %v1946
    %2161 = vmatprep.subr.bf16.mxu0 %v1949
    %2162 = vmatpush1.bf16.msra.mxu0 %v1948
    %2163 = vmatprep.subr.bf16.mxu0 %v1951
    %2164 = vmatpush1.bf16.msra.mxu0 %v1950
    %2165 = vmatprep.subr.bf16.mxu0 %v1953
    %2166 = vmatpush1.bf16.msra.mxu0 %v1952
    %2167 = vmatprep.subr.bf16.mxu0 %v1955
    %2168 = vmatpush1.bf16.msra.mxu0 %v1954
    %2169 = vmatprep.subr.bf16.mxu0 %v1957
    %2170 = vmatpush1.bf16.msra.mxu0 %v1956
    %2171 = vmatprep.subr.bf16.mxu0 %v1959
    %2172 = vmatpush1.bf16.msra.mxu0 %v1958
    %2173 = vmatprep.subr.bf16.mxu0 %v1961
    %2174 = vmatpush1.bf16.msra.mxu0 %v1960
    %2175 = vmatprep.subr.bf16.mxu0 %v1963
    %2176 = vmatpush1.bf16.msra.mxu0 %v1962
    %2177 = vmatprep.subr.bf16.mxu0 %v1965
    %2178 = vmatpush1.bf16.msra.mxu0 %v1964
    %2179 = vmatprep.subr.bf16.mxu0 %v1967
    %2180 = vmatpush1.bf16.msra.mxu0 %v1966
    %2181 = vmatprep.subr.bf16.mxu0 %v1969
    %2182 = vmatpush1.bf16.msra.mxu0 %v1968
    %2183 = vmatprep.subr.bf16.mxu0 %v1971
    %2184 = vmatpush1.bf16.msra.mxu0 %v1970
    %2185 = vmatprep.subr.bf16.mxu0 %v1973
    %2186 = vmatpush1.bf16.msra.mxu0 %v1972
    %2187 = vmatprep.subr.bf16.mxu0 %v1975
    %2188 = vmatpush1.bf16.msra.mxu0 %v1974
    %2189 = vmatprep.mubr.bf16.mxu0 %v1508
    %2190 = vmatmul.mubr.bf16.gmra.mrb[0].mxu0 %v1507
    %v2191 = vpop.f32.mrb[0].mxu0
    %v2192 = vadd.f32 %v2139, %v2191
    %v2193 = vpop.f32.mrb[0].mxu0
    %v2194 = vadd.f32 %v2141, %v2193
    %v2195 = vpop.f32.mrb[0].mxu0
    %v2196 = vadd.f32 %v2143, %v2195
    %v2197 = vpop.f32.mrb[0].mxu0
    %v2198 = vadd.f32 %v2145, %v2197
    %2199 = vmatprep.mubr.bf16.mxu0 %v1514
    %2200 = vmatmul.mubr.bf16.gmra.mrb[0].mxu0 %v1513
    %v2201 = vpop.f32.mrb[0].mxu0
    %v2202 = vadd.f32 %v2149, %v2201
    %v2203 = vpop.f32.mrb[0].mxu0
    %v2204 = vadd.f32 %v2151, %v2203
    %v2205 = vpop.f32.mrb[0].mxu0
    %v2206 = vadd.f32 %v2153, %v2205
    %v2207 = vpop.f32.mrb[0].mxu0
    %v2208 = vadd.f32 %v2155, %v2207
    %2209 = vdwg.mxu0
    %2210 = vmatprep.subr.bf16.mxu0 %v1977
    %2211 = vmatpush1.bf16.msra.mxu0 %v1976
    %2212 = vmatprep.subr.bf16.mxu0 %v1979
    %2213 = vmatpush1.bf16.msra.mxu0 %v1978
    %2214 = vmatprep.subr.bf16.mxu0 %v1981
    %2215 = vmatpush1.bf16.msra.mxu0 %v1980
    %2216 = vmatprep.subr.bf16.mxu0 %v1983
    %2217 = vmatpush1.bf16.msra.mxu0 %v1982
    %2218 = vmatprep.subr.bf16.mxu0 %v1985
    %2219 = vmatpush1.bf16.msra.mxu0 %v1984
    %2220 = vmatprep.subr.bf16.mxu0 %v1987
    %2221 = vmatpush1.bf16.msra.mxu0 %v1986
    %2222 = vmatprep.subr.bf16.mxu0 %v1989
    %2223 = vmatpush1.bf16.msra.mxu0 %v1988
    %2224 = vmatprep.subr.bf16.mxu0 %v1991
    %2225 = vmatpush1.bf16.msra.mxu0 %v1990
    %2226 = vmatprep.subr.bf16.mxu0 %v1993
    %2227 = vmatpush1.bf16.msra.mxu0 %v1992
    %2228 = vmatprep.subr.bf16.mxu0 %v1995
    %2229 = vmatpush1.bf16.msra.mxu0 %v1994
    %2230 = vmatprep.subr.bf16.mxu0 %v1997
    %2231 = vmatpush1.bf16.msra.mxu0 %v1996
    %2232 = vmatprep.subr.bf16.mxu0 %v1999
    %2233 = vmatpush1.bf16.msra.mxu0 %v1998
    %2234 = vmatprep.subr.bf16.mxu0 %v2001
    %2235 = vmatpush1.bf16.msra.mxu0 %v2000
    %2236 = vmatprep.subr.bf16.mxu0 %v2003
    %2237 = vmatpush1.bf16.msra.mxu0 %v2002
    %2238 = vmatprep.subr.bf16.mxu0 %v2005
    %2239 = vmatpush1.bf16.msra.mxu0 %v2004
    %2240 = vmatprep.subr.bf16.mxu0 %v2007
    %2241 = vmatpush1.bf16.msra.mxu0 %v2006
    %2242 = vmatprep.mubr.bf16.mxu0 %v1510
    %2243 = vmatmul.mubr.bf16.gmra.mrb[0].mxu0 %v1509
    %v2244 = vpop.f32.mrb[0].mxu0
    %v2245 = vadd.f32 %v2192, %v2244
    %v2246 = vpop.f32.mrb[0].mxu0
    %v2247 = vadd.f32 %v2194, %v2246
    %v2248 = vpop.f32.mrb[0].mxu0
    %v2249 = vadd.f32 %v2196, %v2248
    %v2250 = vpop.f32.mrb[0].mxu0
    %v2251 = vadd.f32 %v2198, %v2250
    %2252 = vmatprep.mubr.bf16.mxu0 %v1516
    %2253 = vmatmul.mubr.bf16.gmra.mrb[0].mxu0 %v1515
    %v2254 = vpop.f32.mrb[0].mxu0
    %v2255 = vadd.f32 %v2202, %v2254
    %v2256 = vpop.f32.mrb[0].mxu0
    %v2257 = vadd.f32 %v2204, %v2256
    %v2258 = vpop.f32.mrb[0].mxu0
    %v2259 = vadd.f32 %v2206, %v2258
    %v2260 = vpop.f32.mrb[0].mxu0
    %v2261 = vadd.f32 %v2208, %v2260
    %2262 = vdwg.mxu0
    %v2263 = vadd.f32 %v2245, %v2249
    %v2264 = vrot.slane %v2263, 4
    %v2265 = vadd.f32 %v2263, %v2264
    %v2266 = vrot.slane %v2265, 2
    %v2267 = vadd.f32 %v2265, %v2266
    %v2268 = vrot.slane %v2267, 1
    %v2269 = vadd.f32 %v2267, %v2268
    %v2270 = vadd.f32 %v2247, %v2251
    %v2271 = vrot.slane %v2270, 4
    %v2272 = vadd.f32 %v2270, %v2271
    %v2273 = vrot.slane %v2272, 2
    %v2274 = vadd.f32 %v2272, %v2273
    %v2275 = vrot.slane %v2274, 1
    %v2276 = vadd.f32 %v2274, %v2275
    %v2277 = vadd.f32 %v2255, %v2259
    %v2278 = vrot.slane %v2277, 4
    %v2279 = vadd.f32 %v2277, %v2278
    %v2280 = vrot.slane %v2279, 2
    %v2281 = vadd.f32 %v2279, %v2280
    %v2282 = vrot.slane %v2281, 1
    %v2283 = vadd.f32 %v2281, %v2282
    %v2284 = vadd.f32 %v2257, %v2261
    %v2285 = vrot.slane %v2284, 4
    %v2286 = vadd.f32 %v2284, %v2285
    %v2287 = vrot.slane %v2286, 2
    %v2288 = vadd.f32 %v2286, %v2287
    %v2289 = vrot.slane %v2288, 1
    %v2290 = vadd.f32 %v2288, %v2289
    %2293 = vrot.lane.b32.xlu0 %v2269, 112
    %v2294 = vpop.permute.xlu0 %2293
    %2295 = vrot.lane.b32.xlu0 %v2283, 112
    %v2296 = vpop.permute.xlu0 %2295
    %2297 = vrot.lane.b32.xlu0 %v2269, 96
    %v2298 = vpop.permute.xlu0 %2297
    %2299 = vrot.lane.b32.xlu0 %v2283, 96
    %v2300 = vpop.permute.xlu0 %2299
    %2301 = vrot.lane.b32.xlu0 %v2269, 80
    %v2302 = vpop.permute.xlu0 %2301
    %2303 = vrot.lane.b32.xlu0 %v2283, 80
    %v2304 = vpop.permute.xlu0 %2303
    %2305 = vrot.lane.b32.xlu0 %v2269, 64
    %v2306 = vpop.permute.xlu0 %2305
    %2307 = vrot.lane.b32.xlu0 %v2283, 64
    %v2308 = vpop.permute.xlu0 %2307
    %2309 = vrot.lane.b32.xlu0 %v2269, 48
    %v2310 = vpop.permute.xlu0 %2309
    %2311 = vrot.lane.b32.xlu0 %v2283, 48
    %v2312 = vpop.permute.xlu0 %2311
    %2313 = vrot.lane.b32.xlu0 %v2269, 32
    %v2314 = vpop.permute.xlu0 %2313
    %2315 = vrot.lane.b32.xlu0 %v2283, 32
    %v2316 = vpop.permute.xlu0 %2315
    %2317 = vrot.lane.b32.xlu0 %v2269, 16
    %v2318 = vpop.permute.xlu0 %2317
    %2319 = vrot.lane.b32.xlu0 %v2283, 16
    %v2320 = vpop.permute.xlu0 %2319
    %2323 = vrot.lane.b32.xlu0 %v2276, 112
    %v2324 = vpop.permute.xlu0 %2323
    %2325 = vrot.lane.b32.xlu0 %v2290, 112
    %v2326 = vpop.permute.xlu0 %2325
    %2327 = vrot.lane.b32.xlu0 %v2276, 96
    %v2328 = vpop.permute.xlu0 %2327
    %2329 = vrot.lane.b32.xlu0 %v2290, 96
    %v2330 = vpop.permute.xlu0 %2329
    %2331 = vrot.lane.b32.xlu0 %v2276, 80
    %v2332 = vpop.permute.xlu0 %2331
    %2333 = vrot.lane.b32.xlu0 %v2290, 80
    %v2334 = vpop.permute.xlu0 %2333
    %2335 = vrot.lane.b32.xlu0 %v2276, 64
    %v2336 = vpop.permute.xlu0 %2335
    %2337 = vrot.lane.b32.xlu0 %v2290, 64
    %v2338 = vpop.permute.xlu0 %2337
    %2339 = vrot.lane.b32.xlu0 %v2276, 48
    %v2340 = vpop.permute.xlu0 %2339
    %2341 = vrot.lane.b32.xlu0 %v2290, 48
    %v2342 = vpop.permute.xlu0 %2341
    %2343 = vrot.lane.b32.xlu0 %v2276, 32
    %v2344 = vpop.permute.xlu0 %2343
    %2345 = vrot.lane.b32.xlu0 %v2290, 32
    %v2346 = vpop.permute.xlu0 %2345
    %2347 = vrot.lane.b32.xlu0 %v2276, 16
    %v2348 = vpop.permute.xlu0 %2347
    %2349 = vrot.lane.b32.xlu0 %v2290, 16
    %v2350 = vpop.permute.xlu0 %2349
    %v2351 = vrot.slane %v2283, 7
    %vm2352 = vcmask 1041409
    %v2353 = vsel %vm2352, %v2351, %v2269
    %v2354 = vrot.slane %v2296, 7
    %v2355 = vsel %vm2352, %v2354, %v2294
    %v2356 = vrot.slane %v2300, 7
    %v2357 = vsel %vm2352, %v2356, %v2298
    %v2358 = vrot.slane %v2304, 7
    %v2359 = vsel %vm2352, %v2358, %v2302
    %v2360 = vrot.slane %v2308, 7
    %v2361 = vsel %vm2352, %v2360, %v2306
    %v2362 = vrot.slane %v2312, 7
    %v2363 = vsel %vm2352, %v2362, %v2310
    %v2364 = vrot.slane %v2316, 7
    %v2365 = vsel %vm2352, %v2364, %v2314
    %v2366 = vrot.slane %v2320, 7
    %v2367 = vsel %vm2352, %v2366, %v2318
    %v2368 = vrot.slane %v2290, 7
    %v2369 = vsel %vm2352, %v2368, %v2276
    %v2370 = vrot.slane %v2326, 7
    %v2371 = vsel %vm2352, %v2370, %v2324
    %v2372 = vrot.slane %v2330, 7
    %v2373 = vsel %vm2352, %v2372, %v2328
    %v2374 = vrot.slane %v2334, 7
    %v2375 = vsel %vm2352, %v2374, %v2332
    %v2376 = vrot.slane %v2338, 7
    %v2377 = vsel %vm2352, %v2376, %v2336
    %v2378 = vrot.slane %v2342, 7
    %v2379 = vsel %vm2352, %v2378, %v2340
    %v2380 = vrot.slane %v2346, 7
    %v2381 = vsel %vm2352, %v2380, %v2344
    %v2382 = vrot.slane %v2350, 7
    %v2383 = vsel %vm2352, %v2382, %v2348
    %v2400 = vcombine.low %v2353, %v2357
    %v2402 = vunpack.c.l.s4 1983009808
    %v2403 = vunpack.c.0.s8 %v2402
    %v2404 = vlaneseq
    %v2405 = vshrl.u32 %v2404, 7
    %v2406 = vsub.s32 %v2403, %v2405
    %v2407 = vrot.slane %v2400, %v2406
    %v2408 = vcombine.low %v2355, %v2359
    %v2410 = vunpack.c.l.s4 1983009808
    %v2411 = vunpack.c.0.s8 %v2410
    %v2412 = vlaneseq
    %v2413 = vshrl.u32 %v2412, 7
    %v2414 = vsub.s32 %v2411, %v2413
    %v2415 = vrot.slane %v2408, %v2414
    %v2416 = vcombine.low %v2361, %v2365
    %v2418 = vunpack.c.l.s4 1983009808
    %v2419 = vunpack.c.0.s8 %v2418
    %v2420 = vlaneseq
    %v2421 = vshrl.u32 %v2420, 7
    %v2422 = vsub.s32 %v2419, %v2421
    %v2423 = vrot.slane %v2416, %v2422
    %v2424 = vcombine.low %v2363, %v2367
    %v2426 = vunpack.c.l.s4 1983009808
    %v2427 = vunpack.c.0.s8 %v2426
    %v2428 = vlaneseq
    %v2429 = vshrl.u32 %v2428, 7
    %v2430 = vsub.s32 %v2427, %v2429
    %v2431 = vrot.slane %v2424, %v2430
    %v2432 = vcombine.low %v2407, %v2415
    %v2434 = vunpack.c.l.s4 1934713408
    %v2435 = vunpack.c.0.s8 %v2434
    %v2436 = vlaneseq
    %v2437 = vshrl.u32 %v2436, 7
    %v2438 = vsub.s32 %v2435, %v2437
    %v2439 = vrot.slane %v2432, %v2438
    %v2440 = vcombine.low %v2423, %v2431
    %v2442 = vunpack.c.l.s4 1934713408
    %v2443 = vunpack.c.0.s8 %v2442
    %v2444 = vlaneseq
    %v2445 = vshrl.u32 %v2444, 7
    %v2446 = vsub.s32 %v2443, %v2445
    %v2447 = vrot.slane %v2440, %v2446
    %v2448 = vcombine.low %v2439, %v2447
    %v2449 = vcombine.high %v2439, %v2447
    %v2450 = vcombine.low %v2369, %v2373
    %v2452 = vunpack.c.l.s4 1983009808
    %v2453 = vunpack.c.0.s8 %v2452
    %v2454 = vlaneseq
    %v2455 = vshrl.u32 %v2454, 7
    %v2456 = vsub.s32 %v2453, %v2455
    %v2457 = vrot.slane %v2450, %v2456
    %v2458 = vcombine.low %v2371, %v2375
    %v2460 = vunpack.c.l.s4 1983009808
    %v2461 = vunpack.c.0.s8 %v2460
    %v2462 = vlaneseq
    %v2463 = vshrl.u32 %v2462, 7
    %v2464 = vsub.s32 %v2461, %v2463
    %v2465 = vrot.slane %v2458, %v2464
    %v2466 = vcombine.low %v2377, %v2381
    %v2468 = vunpack.c.l.s4 1983009808
    %v2469 = vunpack.c.0.s8 %v2468
    %v2470 = vlaneseq
    %v2471 = vshrl.u32 %v2470, 7
    %v2472 = vsub.s32 %v2469, %v2471
    %v2473 = vrot.slane %v2466, %v2472
    %v2474 = vcombine.low %v2379, %v2383
    %v2476 = vunpack.c.l.s4 1983009808
    %v2477 = vunpack.c.0.s8 %v2476
    %v2478 = vlaneseq
    %v2479 = vshrl.u32 %v2478, 7
    %v2480 = vsub.s32 %v2477, %v2479
    %v2481 = vrot.slane %v2474, %v2480
    %v2482 = vcombine.low %v2457, %v2465
    %v2484 = vunpack.c.l.s4 1934713408
    %v2485 = vunpack.c.0.s8 %v2484
    %v2486 = vlaneseq
    %v2487 = vshrl.u32 %v2486, 7
    %v2488 = vsub.s32 %v2485, %v2487
    %v2489 = vrot.slane %v2482, %v2488
    %v2490 = vcombine.low %v2473, %v2481
    %v2492 = vunpack.c.l.s4 1934713408
    %v2493 = vunpack.c.0.s8 %v2492
    %v2494 = vlaneseq
    %v2495 = vshrl.u32 %v2494, 7
    %v2496 = vsub.s32 %v2493, %v2495
    %v2497 = vrot.slane %v2490, %v2496
    %v2498 = vcombine.low %v2489, %v2497
    %v2499 = vcombine.high %v2489, %v2497
    %vm2500 = vcmask 130048
    %v2501 = vsel %vm2500, %v2448, 0.0
    %v2502 = vsel %vm2500, %v2498, 0.0
    %v2503 = vadd.f32 %v2501, %v2502
    %v2504 = vrot.slane %v2503, 4
    %v2505 = vadd.f32 %v2503, %v2504
    %v2506 = vrot.slane %v2505, 2
    %v2507 = vadd.f32 %v2505, %v2506
    %v2508 = vrot.slane %v2507, 1
    %v2509 = vadd.f32 %v2507, %v2508
    %v2510 = vsel %vm2500, %v2449, 0.0
    %v2511 = vsel %vm2500, %v2499, 0.0
    %v2512 = vadd.f32 %v2510, %v2511
    %v2513 = vrot.slane %v2512, 4
    %v2514 = vadd.f32 %v2512, %v2513
    %v2515 = vrot.slane %v2514, 2
    %v2516 = vadd.f32 %v2514, %v2515
    %v2517 = vrot.slane %v2516, 1
    %v2518 = vadd.f32 %v2516, %v2517
    %v2519 = vrcp.pop 256.0
    %v2520 = vmul.f32 %v2509, %v2519
    %v2521 = vmul.f32 %v2518, %v2519
    %2523 = vbcast.lane.b32.xlu0 %v2520, 256
    %v2524 = vpop.permute.xlu0 %2523
    %s2526 = sor.u32 256, 8
    %2527 = vbcast.lane.b32.xlu0 %v2520, %s2526
    %v2528 = vpop.permute.xlu0 %2527
    %2530 = vbcast.lane.b32.xlu0 %v2521, 256
    %v2531 = vpop.permute.xlu0 %2530
    %s2533 = sor.u32 256, 8
    %2534 = vbcast.lane.b32.xlu0 %v2521, %s2533
    %v2535 = vpop.permute.xlu0 %2534
    %v2536 = vld [vmem:[%s9] sm:$0xff]
    %v2537 = vld [vmem:[%s9 + $0x8] sm:$0xff]
    %v2538 = vmul.f32 %v2524, %v2536
    %v2539 = vmul.f32 %v2528, %v2537
    %v2540 = vmul.f32 %v2531, %v2536
    %v2541 = vmul.f32 %v2535, %v2537
    %vm2542 = vcmask 31744
    %v2543 = vsel %vm2542, %v2538, 0.0
    %v2544 = vsel %vm2542, %v2539, 0.0
    %v2545 = vadd.f32 %v2543, %v2544
    %v2546 = vrot.slane %v2545, 4
    %v2547 = vadd.f32 %v2545, %v2546
    %v2548 = vrot.slane %v2547, 2
    %v2549 = vadd.f32 %v2547, %v2548
    %v2550 = vrot.slane %v2549, 1
    %v2551 = vadd.f32 %v2549, %v2550
    %v2552 = vsel %vm2542, %v2540, 0.0
    %v2553 = vsel %vm2542, %v2541, 0.0
    %v2554 = vadd.f32 %v2552, %v2553
    %v2555 = vrot.slane %v2554, 4
    %v2556 = vadd.f32 %v2554, %v2555
    %v2557 = vrot.slane %v2556, 2
    %v2558 = vadd.f32 %v2556, %v2557
    %v2559 = vrot.slane %v2558, 1
    %v2560 = vadd.f32 %v2558, %v2559
    %v2561 = vld [vmem:[%s10] sm:$0x1]
    %v2563 = vlaneseq
    %v2564 = vshrl.u32 %v2563, 7
    %v2565 = vsub.s32 0, %v2564
    %v2566 = vrot.slane %v2561, %v2565
    %v2568 = vadd.f32 %v2551, %v2566
    %v2569 = vadd.f32 %v2560, %v2566
    %v2570 = vmax.f32 %v2568, 0.0
    %v2571 = vmax.f32 %v2569, 0.0
    %v2572 = vlaneseq
    %v2573 = vshrl.u32 %v2572, 7
    %v2574 = vsub.s32 0, %v2573
    %v2575 = vrot.slane %v2570, %v2574
    %2577 = vbcast.lane.b32.xlu0 %v2575, 256
    %v2578 = vpop.permute.xlu0 %2577
    %v2579 = vlaneseq
    %v2580 = vshrl.u32 %v2579, 7
    %v2581 = vsub.s32 0, %v2580
    %v2582 = vrot.slane %v2571, %v2581
    %2584 = vbcast.lane.b32.xlu0 %v2582, 256
    %v2585 = vpop.permute.xlu0 %2584
    %v2586 = vld [vmem:[%s11] sm:$0xf]
    %v2587 = vmul.f32 %v2578, %v2586
    %v2588 = vmul.f32 %v2585, %v2586
    %vm2589 = vcmask 125952
    %v2590 = vsel %vm2589, %v2587, 0.0
    %v2591 = vrot.slane %v2590, 4
    %v2592 = vadd.f32 %v2590, %v2591
    %v2593 = vrot.slane %v2592, 2
    %v2594 = vadd.f32 %v2592, %v2593
    %v2595 = vrot.slane %v2594, 1
    %v2596 = vadd.f32 %v2594, %v2595
    %v2597 = vsel %vm2589, %v2588, 0.0
    %v2598 = vrot.slane %v2597, 4
    %v2599 = vadd.f32 %v2597, %v2598
    %v2600 = vrot.slane %v2599, 2
    %v2601 = vadd.f32 %v2599, %v2600
    %v2602 = vrot.slane %v2601, 1
    %v2603 = vadd.f32 %v2601, %v2602
    %v2604 = vld [vmem:[%s12] sm:$0x1]
    %v2606 = vlaneseq
    %v2607 = vshrl.u32 %v2606, 7
    %v2608 = vsub.s32 0, %v2607
    %v2609 = vrot.slane %v2604, %v2608
    %v2611 = vadd.f32 %v2596, %v2609
    %v2612 = vadd.f32 %v2603, %v2609
    %v2613 = vxor.u32 %v2611, 2147483648
    %v2614 = vxor.u32 %v2612, 2147483648
    %v2615 = vmul.f32 %v2613, 1.442695
    %v2616 = vpow.pop %v2615
    %v2617 = vmul.f32 %v2614, 1.442695
    %v2618 = vpow.pop %v2617
    %v2619 = vadd.f32 %v2616, 1.0
    %v2620 = vadd.f32 %v2618, 1.0
    %v2621 = vrcp.pop %v2619
    %v2622 = vmul.f32 1.0, %v2621
    %v2623 = vrcp.pop %v2620
    %v2624 = vmul.f32 1.0, %v2623
    %v2625 = vmul.f32 %v2622, 0.1
    %v2626 = vmul.f32 %v2624, 0.1
    %v2629 = vrot.slane %v2626, 7
    %v2630 = vsel %vm2352, %v2629, %v2625
    %2632 = vrot.lane.b32.xlu0 %v2630, 16
    %v2633 = vpop.permute.xlu0 %2632
    %2635 = vrot.lane.b32.xlu0 %v2630, 32
    %v2636 = vpop.permute.xlu0 %2635
    %2638 = vrot.lane.b32.xlu0 %v2630, 48
    %v2639 = vpop.permute.xlu0 %2638
    %2641 = vrot.lane.b32.xlu0 %v2630, 64
    %v2642 = vpop.permute.xlu0 %2641
    %2644 = vrot.lane.b32.xlu0 %v2630, 80
    %v2645 = vpop.permute.xlu0 %2644
    %2647 = vrot.lane.b32.xlu0 %v2630, 96
    %v2648 = vpop.permute.xlu0 %2647
    %2650 = vrot.lane.b32.xlu0 %v2630, 112
    %v2651 = vpop.permute.xlu0 %2650
    %v2653 = vsel %vm2500, %v2630, %v2633
    %vm2654 = vcmask 261120
    %v2655 = vsel %vm2654, %v2653, %v2636
    %vm2656 = vcmask 392192
    %v2657 = vsel %vm2656, %v2655, %v2639
    %vm2658 = vcmask 523264
    %v2659 = vsel %vm2658, %v2657, %v2642
    %vm2660 = vcmask 654336
    %v2661 = vsel %vm2660, %v2659, %v2645
    %vm2662 = vcmask 785408
    %v2663 = vsel %vm2662, %v2661, %v2648
    %vm2664 = vcmask 916480
    %v2665 = vsel %vm2664, %v2663, %v2651
    %v2667 = vcombine.low %v2665, %v2665
    %v2669 = vunpack.c.l.s4 1966171168
    %v2670 = vunpack.c.0.s8 %v2669
    %v2671 = vlaneseq
    %v2672 = vshrl.u32 %v2671, 7
    %v2673 = vsub.s32 %v2670, %v2672
    %v2674 = vrot.slane %v2667, %v2673
    %v2675 = vcombine.high %v2674, %v2674
    %v2677 = vunpack.c.l.s4 1966171168
    %v2678 = vunpack.c.0.s8 %v2677
    %v2679 = vlaneseq
    %v2680 = vshrl.u32 %v2679, 7
    %v2681 = vsub.s32 %v2678, %v2680
    %v2682 = vrot.slane %v2674, %v2681
    %v2684 = vunpack.c.l.s4 1966171168
    %v2685 = vunpack.c.0.s8 %v2684
    %v2686 = vlaneseq
    %v2687 = vshrl.u32 %v2686, 7
    %v2688 = vsub.s32 %v2685, %v2687
    %v2689 = vrot.slane %v2675, %v2688
    %v2690 = vlaneseq
    %v2691 = vshrl.u32 %v2690, 7
    %v2692 = vsub.s32 0, %v2691
    %v2693 = vrot.slane %v2682, %v2692
    %v2694 = vlaneseq
    %v2695 = vshrl.u32 %v2694, 7
    %v2696 = vsub.s32 1, %v2695
    %v2697 = vrot.slane %v2682, %v2696
    %v2698 = vlaneseq
    %v2699 = vshrl.u32 %v2698, 7
    %v2700 = vsub.s32 0, %v2699
    %v2701 = vrot.slane %v2689, %v2700
    %v2702 = vlaneseq
    %v2703 = vshrl.u32 %v2702, 7
    %v2704 = vsub.s32 1, %v2703
    %v2705 = vrot.slane %v2689, %v2704
    %v2710 = vmul.f32 %v2245, %v2693
    %v2711 = vmul.f32 %v2247, %v2697
    %v2712 = vmul.f32 %v2249, %v2693
    %v2713 = vmul.f32 %v2251, %v2697
    %v2714 = vmul.f32 %v2255, %v2701
    %v2715 = vmul.f32 %v2257, %v2705
    %v2716 = vmul.f32 %v2259, %v2701
    %v2717 = vmul.f32 %v2261, %v2705
    %v2718 = vadd.f32 %v86, %v2710
    %v2719 = vadd.f32 %v87, %v2711
    %v2720 = vadd.f32 %v88, %v2712
    %v2721 = vadd.f32 %v89, %v2713
    %v2722 = vadd.f32 %v90, %v2714
    %v2723 = vadd.f32 %v91, %v2715
    %v2724 = vadd.f32 %v92, %v2716
    %v2725 = vadd.f32 %v93, %v2717
    %2726 = vst [vmem:[#allocation8] sm:$0xff] %v2718
    %2727 = vst [vmem:[#allocation8 + $0x8] sm:$0xff] %v2719
    %2728 = vst [vmem:[#allocation8 + $0x10] sm:$0xff] %v2720
    %2729 = vst [vmem:[#allocation8 + $0x18] sm:$0xff] %v2721
    %2730 = vst [vmem:[#allocation8 + $0x20] sm:$0xff] %v2722
    %2731 = vst [vmem:[#allocation8 + $0x28] sm:$0xff] %v2723
    %2732 = vst [vmem:[#allocation8 + $0x30] sm:$0xff] %v2724
    %2733 = vst [vmem:[#allocation8 + $0x38] sm:$0xff] %v2725
    // Predicated region
    $region66: #{tpu_custom_call.1} parent=1 // pred_check
      _
    $region67: #{tpu_custom_call.1} parent=1 // pred_check_branch
      %2735 = sbr.rel (0) target = $region69
    $region68: #{tpu_custom_call.1} parent=1 // pred_region
      %s2737 = ssub.s32 1024, 1024
      %2738 = vsyncadd [#allocation4], %s2737
      %s2739 = sshll.u32 [#allocation8], 4
      %s2740 = int_to_ptr.vmem [resolvable:$true] %s2739
      %2745 = dma.vmem_to_hbm [thread:$0]  %s2740, 1024, %s13, [#allocation4], 256, 256, 16
    $region69: #{tpu_custom_call.1} parent=1 // pred_fallthru
      _
    // Predicated region
    $region70: #{tpu_custom_call.1} parent=1 // pred_check
      _
    $region71: #{tpu_custom_call.1} parent=1 // pred_check_branch
      %2747 = sbr.rel (0) target = $region73
    $region72: #{tpu_custom_call.1} parent=1 // pred_region
      %2748 = dma.done [#allocation4], 1024
    $region73: #{tpu_custom_call.1} parent=1 // pred_fallthru
      _
    %2749 = vsyncpa [#allocation3], 1
    %2750 = vsyncpa [#allocation6], 1
    %2751 = vsyncpa [#allocation4], 1

</llo_original>
